<compile_context>
chip_gen: v7x
topology: tpu7x:2x2x1
jax: 0.10.0
libtpu: 0.0.40
codegen_flags: <defaults>
</compile_context>

<pallas_src>
import functools

import jax
import jax.numpy as jnp
from jax.experimental import pallas as pl
from jax.experimental.pallas import tpu as pltpu


def _round_up(a, b):
    return ((a + b - 1) // b) * b


def _choose_tile(E, N, F_pad, H, n_out, tile_e):
    """Pick the edge-tile width: big enough to amortize per-step overhead,
    small enough to fit the O(N*TILE) one-hot intermediates in VMEM, and
    split so the grid keeps >= 2 steps for v7x's two TensorCores."""
    assert tile_e % 128 == 0, "tile_e must be a multiple of 128 (lane width)"
    # Approximate f32 VMEM bytes per edge column (one-hots, fused gather
    # results, hidden acts, net_out, double-buffered idx/out tiles).
    bytes_per_col = 4 * (2 * N + 2 * (F_pad + H) + H + n_out + 2 * F_pad + 8)
    budget = 16 * 1024 * 1024          # stays well inside v7x's 64 MiB VMEM
    te_cap = max(128, (budget // bytes_per_col) // 128 * 128)
    tile = min(tile_e, te_cap, _round_up(E, 128))
    # Keep >= 2 grid steps when there is enough work (megacore balance).
    if _round_up(E, tile) // tile < 2 and E > 128:
        tile = max(128, _round_up((E + 1) // 2, 128))
    return tile


def gradient_layer_kernel(idx_ref, s_dst_ref, s_src_ref, b1_ref, w2_ref,
                          b2_ref, out_ref, *, f_pad, kernel_param):
    _, N = s_dst_ref.shape
    idx = idx_ref[...]                                        # (2, TE) int32

    # One-hot edge selection matrices, built from an (N, 1) iota column
    # broadcast inside the compare (no full (N, TE) iota kept live).
    node_iota = jax.lax.broadcasted_iota(jnp.int32, (N, 1), 0)
    oh_src = (node_iota == idx[0:1, :]).astype(jnp.float32)   # (N, TE)
    oh_dst = (node_iota == idx[1:2, :]).astype(jnp.float32)   # (N, TE)

    # Fused gather + first-Linear partials: rows [:f_pad] are the gathered
    # node features, rows [f_pad:] are already (w1-half)^T @ x_endpoint^T.
    g_dst = jnp.dot(s_dst_ref[...], oh_dst,
                    preferred_element_type=jnp.float32)        # (F_pad+H, TE)
    g_src = jnp.dot(s_src_ref[...], oh_src,
                    preferred_element_type=jnp.float32)        # (F_pad+H, TE)

    x_dst_T = g_dst[:f_pad, :]                                 # (F_pad, TE)
    x_src_T = g_src[:f_pad, :]

    h = jnp.tanh(g_dst[f_pad:, :] + g_src[f_pad:, :] + b1_ref[...])   # (H, TE)
    net_out = (jnp.dot(w2_ref[...], h, preferred_element_type=jnp.float32)
               + b2_ref[...])                                  # (n_out, TE)

    if kernel_param == '12':       # both kernel scalars learned
        k1 = net_out[0:1, :]
        k2 = net_out[1:2, :]
        out = k1 * (x_dst_T - k2 * x_src_T)
    elif kernel_param == '1':      # k2 fixed to 1
        k1 = net_out[0:1, :]
        out = k1 * (x_dst_T - x_src_T)
    else:                          # '2': k1 fixed to 1
        k2 = net_out[0:1, :]
        out = x_dst_T - k2 * x_src_T

    out_ref[...] = out.astype(out_ref.dtype)


def gradient_layer_forward_fe(x, edge_index, params, *, tile_e=2048,
                              kernel_param='12'):
    """x: (N, F) f32, edge_index: (2, E) int32.  Returns lane-dense (F, E)."""
    w1, b1, w2, b2 = params
    N, F = x.shape
    E = edge_index.shape[1]
    H = w1.shape[1]
    F_pad = _round_up(F, 8)        # sublane-aligned slice boundary in-kernel
    hi = jax.lax.Precision.HIGHEST

    # Wrapper-side glue (tiny, O(H*N)): fold each half of w1 into the node
    # table and stack under x^T so one MXU call per endpoint does both the
    # gather and the first-layer partial sum.
    xT_raw = x.T.astype(jnp.float32)                               # (F, N)
    xT = jnp.pad(xT_raw, ((0, F_pad - F), (0, 0)))                 # (F_pad, N)
    w_dst = jnp.dot(w1[:F].T.astype(jnp.float32), xT_raw, precision=hi)  # (H, N)
    w_src = jnp.dot(w1[F:].T.astype(jnp.float32), xT_raw, precision=hi)  # (H, N)
    s_dst = jnp.concatenate([xT, w_dst], axis=0)                   # (F_pad+H, N)
    s_src = jnp.concatenate([xT, w_src], axis=0)
    b1_T = jnp.reshape(b1.astype(jnp.float32), (H, 1))

    # Only carry the output rows of the second Linear that are actually used.
    if kernel_param == '12':
        w2_T = w2.T.astype(jnp.float32)                            # (2, H)
        b2_T = jnp.reshape(b2.astype(jnp.float32), (2, 1))
    elif kernel_param == '1':
        w2_T = w2[:, 0:1].T.astype(jnp.float32)                    # (1, H)
        b2_T = jnp.reshape(b2[:, 0:1].astype(jnp.float32), (1, 1))
    elif kernel_param == '2':
        w2_T = w2[:, 1:2].T.astype(jnp.float32)                    # (1, H)
        b2_T = jnp.reshape(b2[:, 1:2].astype(jnp.float32), (1, 1))
    else:
        raise NotImplementedError(f"kernel_param={kernel_param!r}")
    n_out = w2_T.shape[0]

    tile = _choose_tile(E, N, F_pad, H, n_out, tile_e)
    E_pad = _round_up(E, tile)
    edge_index_p = jnp.pad(edge_index.astype(jnp.int32),
                           ((0, 0), (0, E_pad - E)))               # padded edges -> node 0

    grid = (E_pad // tile,)
    const = lambda shape: pl.BlockSpec(shape, lambda e: tuple(0 for _ in shape))

    out_fe = pl.pallas_call(
        functools.partial(gradient_layer_kernel, f_pad=F_pad,
                          kernel_param=kernel_param),
        out_shape=jax.ShapeDtypeStruct((F_pad, E_pad), x.dtype),
        grid_spec=pltpu.PrefetchScalarGridSpec(
            num_scalar_prefetch=0,
            grid=grid,
            in_specs=[
                pl.BlockSpec((2, tile), lambda e: (0, e)),   # edge-index tile
                const((F_pad + H, N)),   # S_dst (resident across grid)
                const((F_pad + H, N)),   # S_src
                const((H, 1)),           # b1^T
                const((n_out, H)),       # w2^T (sliced per kernel_param)
                const((n_out, 1)),       # b2^T
            ],
            out_specs=pl.BlockSpec((F_pad, tile), lambda e: (0, e)),
        ),
        compiler_params=pltpu.CompilerParams(
            dimension_semantics=("parallel",),   # edge tiles shard across TCs (v7x)
            vmem_limit_bytes=32 * 1024 * 1024),  # explicit; tile cap keeps usage far below
    )(edge_index_p, s_dst, s_src, b1_T, w2_T, b2_T)

    # Trim the F / E padding; stays lane-dense (F, E), no transpose.
    return out_fe[:F, :E]


def gradient_layer_forward(x, edge_index, params, *, tile_e=2048,
                           kernel_param='12'):
    """PyTorch-compatible (E, F) output.  The .T is an extra HBM pass -
    prefer gradient_layer_forward_fe for downstream fusion."""
    return gradient_layer_forward_fe(x, edge_index, params, tile_e=tile_e,
                                     kernel_param=kernel_param).T


def gradient_layer_reference(x, edge_index, params, kernel_param='12'):
    """Pure-JAX reference mirroring the PyTorch forward (kernel_feature='both')."""
    w1, b1, w2, b2 = params
    x_src = x[edge_index[0]]
    x_dst = x[edge_index[1]]
    net_in = jnp.concatenate([x_dst, x_src], axis=-1)
    h = jnp.tanh(net_in @ w1 + b1)
    net_out = h @ w2 + b2
    k1 = net_out[:, 0:1]
    k2 = net_out[:, 1:2]
    if kernel_param == '1':
        k2 = jnp.ones_like(k2)
    elif kernel_param == '2':
        k1 = jnp.ones_like(k1)
    return k1 * (x_dst - k2 * x_src)


if __name__ == "__main__":
    key = jax.random.PRNGKey(0)
    k_x, k_e0, k_e1, k_w1, k_b1, k_w2, k_b2 = jax.random.split(key, 7)

    # nodes, feature dim, hidden, edges (E is not a tile multiple to exercise
    # padding; the tile chooser splits it into 2 balanced tiles for v7x).
    N, F, H, E = 64, 8, 32, 2000

    x = jax.random.normal(k_x, (N, F), dtype=jnp.float32)
    edge_index = jnp.stack([
        jax.random.randint(k_e0, (E,), 0, N, dtype=jnp.int32),
        jax.random.randint(k_e1, (E,), 0, N, dtype=jnp.int32),
    ], axis=0)                                            # (2, E)

    # Synthetic net parameters: Linear(2F->H) -> tanh -> Linear(H->2).
    w1 = jax.random.normal(k_w1, (2 * F, H), dtype=jnp.float32) * 0.1
    b1 = jax.random.normal(k_b1, (1, H), dtype=jnp.float32) * 0.1
    w2 = jax.random.normal(k_w2, (H, 2), dtype=jnp.float32) * 0.1
    b2 = jax.random.normal(k_b2, (1, 2), dtype=jnp.float32) * 0.1
    params = (w1, b1, w2, b2)

    # Preferred lane-dense (F, E) path (no wrapper transpose).
    out_fe = jax.block_until_ready(gradient_layer_forward_fe(x, edge_index, params))
    ref = gradient_layer_reference(x, edge_index, params)
    assert out_fe.shape == (F, E)
    assert jnp.allclose(out_fe, ref.T, rtol=1e-3, atol=1e-3), "fe-layout mismatch"

    # PyTorch-shaped (E, F) path plus the kernel_param variants.
    for kp in ('12', '1', '2'):
        out = jax.block_until_ready(
            gradient_layer_forward(x, edge_index, params, kernel_param=kp))
        ref_kp = gradient_layer_reference(x, edge_index, params, kernel_param=kp)
        assert out.shape == (E, F)
        assert jnp.allclose(out, ref_kp, rtol=1e-3, atol=1e-3), f"mismatch kp={kp}"

    # TODO(synk): kernel_feature in {'src','dst'}, the net=None subtraction path
    # and the ModuleList output-concat are thin wrapper variants not exercised
    # here; for very large N (one-hot gather ~8*N*TILE bytes) a scalar-prefetch
    # DMA row-gather fallback would replace the MXU one-hot gather.
    print("KERNEL_OK")
</pallas_src>

<mosaic_0001>
module attributes {stable_mosaic.version = 11 : i64} {
  func.func @gradient_layer_kernel(%arg0: i32, %arg1: memref<2x1024xi32, #tpu.memory_space<vmem>>, %arg2: memref<40x64xf32, #tpu.memory_space<vmem>>, %arg3: memref<40x64xf32, #tpu.memory_space<vmem>>, %arg4: memref<32x1xf32, #tpu.memory_space<vmem>>, %arg5: memref<2x32xf32, #tpu.memory_space<vmem>>, %arg6: memref<2x1xf32, #tpu.memory_space<vmem>>, %arg7: memref<8x1024xf32, #tpu.memory_space<vmem>>) attributes {dimension_semantics = [#tpu.dimension_semantics<parallel>], iteration_bounds = array<i64: 2>, scalar_prefetch = 0 : i64, scratch_operands = 0 : i64, tpu.core_type = #tpu.core_type<tc>, window_params = [{transform_indices = @transform_0, window_bounds = array<i64: 2, 1024>}, {pipeline_mode = #tpu.pipeline_mode<synchronous>, transform_indices = @transform_1, window_bounds = array<i64: 40, 64>}, {pipeline_mode = #tpu.pipeline_mode<synchronous>, transform_indices = @transform_2, window_bounds = array<i64: 40, 64>}, {pipeline_mode = #tpu.pipeline_mode<synchronous>, transform_indices = @transform_3, window_bounds = array<i64: 32, 1>}, {pipeline_mode = #tpu.pipeline_mode<synchronous>, transform_indices = @transform_4, window_bounds = array<i64: 2, 32>}, {pipeline_mode = #tpu.pipeline_mode<synchronous>, transform_indices = @transform_5, window_bounds = array<i64: 2, 1>}, {transform_indices = @transform_6, window_bounds = array<i64: 8, 1024>}]} {
    %c0 = arith.constant 0 : index
    %c0_0 = arith.constant 0 : index
    %0 = vector.load %arg1[%c0, %c0_0] : memref<2x1024xi32, #tpu.memory_space<vmem>>, vector<2x1024xi32>
    %1 = tpu.iota {dimensions = array<i32: 0>} : vector<64x1xi32>
    %2 = vector.extract_strided_slice %0 {offsets = [0, 0], sizes = [1, 1024], strides = [1, 1]} : vector<2x1024xi32> to vector<1x1024xi32>
    %3 = vector.broadcast %1 : vector<64x1xi32> to vector<64x1024xi32>
    %4 = vector.broadcast %2 : vector<1x1024xi32> to vector<64x1024xi32>
    %5 = arith.cmpi eq, %3, %4 : vector<64x1024xi32>
    %6 = arith.extui %5 : vector<64x1024xi1> to vector<64x1024xi32>
    %7 = arith.sitofp %6 : vector<64x1024xi32> to vector<64x1024xf32>
    %8 = vector.extract_strided_slice %0 {offsets = [1, 0], sizes = [1, 1024], strides = [1, 1]} : vector<2x1024xi32> to vector<1x1024xi32>
    %9 = vector.broadcast %1 : vector<64x1xi32> to vector<64x1024xi32>
    %10 = vector.broadcast %8 : vector<1x1024xi32> to vector<64x1024xi32>
    %11 = arith.cmpi eq, %9, %10 : vector<64x1024xi32>
    %12 = arith.extui %11 : vector<64x1024xi1> to vector<64x1024xi32>
    %13 = arith.sitofp %12 : vector<64x1024xi32> to vector<64x1024xf32>
    %c0_1 = arith.constant 0 : index
    %c0_2 = arith.constant 0 : index
    %14 = vector.load %arg2[%c0_1, %c0_2] : memref<40x64xf32, #tpu.memory_space<vmem>>, vector<40x64xf32>
    %cst = arith.constant dense<0.000000e+00> : vector<40x1024xf32>
    %15 = tpu.matmul %14, %13, %cst {dimension_numbers = #tpu.dot_dimension_numbers<[1], [0], [0], [1], [0, 0, 1, 1], [], []>} : vector<40x64xf32>, vector<64x1024xf32>, vector<40x1024xf32> -> vector<40x1024xf32>
    %c0_3 = arith.constant 0 : index
    %c0_4 = arith.constant 0 : index
    %16 = vector.load %arg3[%c0_3, %c0_4] : memref<40x64xf32, #tpu.memory_space<vmem>>, vector<40x64xf32>
    %cst_5 = arith.constant dense<0.000000e+00> : vector<40x1024xf32>
    %17 = tpu.matmul %16, %7, %cst_5 {dimension_numbers = #tpu.dot_dimension_numbers<[1], [0], [0], [1], [0, 0, 1, 1], [], []>} : vector<40x64xf32>, vector<64x1024xf32>, vector<40x1024xf32> -> vector<40x1024xf32>
    %18 = vector.extract_strided_slice %15 {offsets = [0, 0], sizes = [8, 1024], strides = [1, 1]} : vector<40x1024xf32> to vector<8x1024xf32>
    %19 = vector.extract_strided_slice %17 {offsets = [0, 0], sizes = [8, 1024], strides = [1, 1]} : vector<40x1024xf32> to vector<8x1024xf32>
    %20 = vector.extract_strided_slice %15 {offsets = [8, 0], sizes = [32, 1024], strides = [1, 1]} : vector<40x1024xf32> to vector<32x1024xf32>
    %21 = vector.extract_strided_slice %17 {offsets = [8, 0], sizes = [32, 1024], strides = [1, 1]} : vector<40x1024xf32> to vector<32x1024xf32>
    %22 = arith.addf %20, %21 : vector<32x1024xf32>
    %c0_6 = arith.constant 0 : index
    %c0_7 = arith.constant 0 : index
    %23 = vector.load %arg4[%c0_6, %c0_7] : memref<32x1xf32, #tpu.memory_space<vmem>>, vector<32x1xf32>
    %24 = vector.broadcast %23 : vector<32x1xf32> to vector<32x1024xf32>
    %25 = arith.addf %22, %24 : vector<32x1024xf32>
    %26 = math.tanh %25 : vector<32x1024xf32>
    %c0_8 = arith.constant 0 : index
    %c0_9 = arith.constant 0 : index
    %27 = vector.load %arg5[%c0_8, %c0_9] : memref<2x32xf32, #tpu.memory_space<vmem>>, vector<2x32xf32>
    %cst_10 = arith.constant dense<0.000000e+00> : vector<2x1024xf32>
    %28 = tpu.matmul %27, %26, %cst_10 {dimension_numbers = #tpu.dot_dimension_numbers<[1], [0], [0], [1], [0, 0, 1, 1], [], []>} : vector<2x32xf32>, vector<32x1024xf32>, vector<2x1024xf32> -> vector<2x1024xf32>
    %c0_11 = arith.constant 0 : index
    %c0_12 = arith.constant 0 : index
    %29 = vector.load %arg6[%c0_11, %c0_12] : memref<2x1xf32, #tpu.memory_space<vmem>>, vector<2x1xf32>
    %30 = vector.broadcast %29 : vector<2x1xf32> to vector<2x1024xf32>
    %31 = arith.addf %28, %30 : vector<2x1024xf32>
    %32 = vector.extract_strided_slice %31 {offsets = [0, 0], sizes = [1, 1024], strides = [1, 1]} : vector<2x1024xf32> to vector<1x1024xf32>
    %33 = vector.extract_strided_slice %31 {offsets = [1, 0], sizes = [1, 1024], strides = [1, 1]} : vector<2x1024xf32> to vector<1x1024xf32>
    %34 = vector.broadcast %33 : vector<1x1024xf32> to vector<8x1024xf32>
    %35 = arith.mulf %34, %19 : vector<8x1024xf32>
    %36 = arith.subf %18, %35 : vector<8x1024xf32>
    %37 = vector.broadcast %32 : vector<1x1024xf32> to vector<8x1024xf32>
    %38 = arith.mulf %37, %36 : vector<8x1024xf32>
    %c0_13 = arith.constant 0 : index
    %c0_14 = arith.constant 0 : index
    %39 = vector.load %arg7[%c0_13, %c0_14] : memref<8x1024xf32, #tpu.memory_space<vmem>>, vector<8x1024xf32>
    tpu.vector_store %arg7[%c0_13, %c0_14], %38 {strides = array<i32>} : memref<8x1024xf32, #tpu.memory_space<vmem>>, vector<8x1024xf32>,
    return
  }
  func.func @transform_0(%arg0: i32) -> (i32, i32) {
    %c0_i32 = arith.constant 0 : i32
    %c0_i32_0 = arith.constant 0 : i32
    return %c0_i32, %arg0 : i32, i32
  }
  func.func @transform_1(%arg0: i32) -> (i32, i32) {
    %c0_i32 = arith.constant 0 : i32
    %c0_i32_0 = arith.constant 0 : i32
    %c0_i32_1 = arith.constant 0 : i32
    return %c0_i32, %c0_i32_0 : i32, i32
  }
  func.func @transform_2(%arg0: i32) -> (i32, i32) {
    %c0_i32 = arith.constant 0 : i32
    %c0_i32_0 = arith.constant 0 : i32
    %c0_i32_1 = arith.constant 0 : i32
    return %c0_i32, %c0_i32_0 : i32, i32
  }
  func.func @transform_3(%arg0: i32) -> (i32, i32) {
    %c0_i32 = arith.constant 0 : i32
    %c0_i32_0 = arith.constant 0 : i32
    %c0_i32_1 = arith.constant 0 : i32
    return %c0_i32, %c0_i32_0 : i32, i32
  }
  func.func @transform_4(%arg0: i32) -> (i32, i32) {
    %c0_i32 = arith.constant 0 : i32
    %c0_i32_0 = arith.constant 0 : i32
    %c0_i32_1 = arith.constant 0 : i32
    return %c0_i32, %c0_i32_0 : i32, i32
  }
  func.func @transform_5(%arg0: i32) -> (i32, i32) {
    %c0_i32 = arith.constant 0 : i32
    %c0_i32_0 = arith.constant 0 : i32
    %c0_i32_1 = arith.constant 0 : i32
    return %c0_i32, %c0_i32_0 : i32, i32
  }
  func.func @transform_6(%arg0: i32) -> (i32, i32) {
    %c0_i32 = arith.constant 0 : i32
    %c0_i32_0 = arith.constant 0 : i32
    return %c0_i32, %arg0 : i32, i32
  }
}

</mosaic_0001>

<llo_original>
// kernel: tpu_custom_call.1
$region0: #{tpu_custom_call.1}
  #allocation0 [shape = 'u32[]', space=smem, size = 0x4, offset = 0x4, fixed_abs, tag = 'smem constant byte address 0x4 - core index']
  #allocation1 [shape = 'u32[144,128]{1,0:T(1,128)}', space=vmem, size = 0x12000, scoped, tag = 'internal scratch']
  %s0 = inlined_call_operand.hbm [shape: s32[2,2048], index: 0, kind: input, shape index: {}]
  %s1 = inlined_call_operand.vmem [shape: f32[40,64], index: 1, kind: input, shape index: {}]
  %s2 = inlined_call_operand.hbm [shape: f32[40,64], index: 2, kind: input, shape index: {}]
  %s3 = inlined_call_operand.vmem [shape: f32[32,1], index: 3, kind: input, shape index: {}]
  %s4 = inlined_call_operand.vmem [shape: f32[2,32], index: 4, kind: input, shape index: {}]
  %s5 = inlined_call_operand.vmem [shape: f32[2,1], index: 5, kind: input, shape index: {}]
  %s6 = inlined_call_operand.hbm [shape: f32[8,2048], index: 6, kind: output, shape index: {}]
  %s7 = sld [smem:[#allocation0]]
  $region65: #{tpu_custom_call.1} parent=0
    _
  %s9 = ssub.s32 1, %s7
  %s10 = scalar_select 0, %s9, %s7
  $region1: #{tpu_custom_call.1} parent=0
    #allocation2 [shape = 'u8[16384]{0}', space=vmem, size = 0x4000, scoped, tag = 'input window, operand 0']
    #allocation3 [shape = 's32[2]{0}', space=sflag, size = 0x8, scoped, tag = 'scoped memory for tpu_custom_call.1']
    #allocation4 [shape = 's32[2]{0}', space=sflag, size = 0x8, scoped, tag = 'scoped memory for tpu_custom_call.1']
    #allocation5 [shape = 'u8[20480]{0}', space=vmem, size = 0x5000, scoped, tag = 'input window, operand 2, single buffered']
    #allocation6 [shape = 's32[1]{0}', space=sflag, size = 0x4, scoped, tag = 'scoped memory for tpu_custom_call.1']
    #allocation7 [shape = 'u8[65536]{0}', space=vmem, size = 0x10000, scoped, tag = 'output window, operand 0']
    %11 = vsyncpa [#allocation3], 0
    %s12 = scalar_lea.sflag [#allocation3], 1
    %13 = vsyncpa %s12, 0
    %14 = vsyncpa [#allocation6], 0
    %15 = vsyncpa [#allocation4], 0
    %s16 = scalar_lea.sflag [#allocation4], 1
    %17 = vsyncpa %s16, 0
    loop: start=0, step=1, limit=4
    $region2: #{tpu_custom_call.1} parent=1 // loop_pre_header
      _
    $region3: #{tpu_custom_call.1} parent=1 // loop_header
      %s19 = sphi 0, %s23
      %p20 = scmp.ge.s32.totalorder %s19, 4
      %s29 = sphi 0, %s31
      %s32 = sphi 0, %s29
      %s33 = sphi 0, %s32
      %s49 = sphi 0, %s33
      %s53 = sphi 0, %s53
      %s55 = sphi 0, %s53
      %s56 = sphi 0, %s55
      %s70 = sphi 0, %s56
      %s74 = sphi 0, %s74
      %s76 = sphi 0, %s74
      %s77 = sphi 0, %s76
      %s91 = sphi 0, %s77
      %s95 = sphi 0, %s95
      %s97 = sphi 0, %s95
      %s98 = sphi 0, %s97
      %s112 = sphi 0, %s98
      %s116 = sphi 0, %s116
      %s118 = sphi 0, %s116
      %s119 = sphi 0, %s118
      %s133 = sphi 0, %s119
      %s137 = sphi 0, %s137
      %s139 = sphi 0, %s137
      %s140 = sphi 0, %s139
      %s154 = sphi 0, %s140
      %s160 = sphi 0, %s162
      %s163 = sphi 0, %s160
      %s164 = sphi 0, %s163
      %s180 = sphi 0, %s164
    $region4: #{tpu_custom_call.1} parent=1 // loop_header_branch
      %22 = sbr.rel (%p20) target = $region8
    $region5: #{tpu_custom_call.1} parent=1 // loop_body
      %s24 = ssub.s32 %s19, 1
      %s25 = ssub.s32 %s19, 2
      %s26 = sadd.s32 %s19, 1
      %s27 = ssub.s32 %s19, %s26
      %p28 = scmp.eq.s32.totalorder %s27, 0
      %s30 = sadd.s32 %s29, 1
      %s31 = scalar_select %p28, %s29, %s30
      %p34 = pneg %p28
      %p35 = scmp.eq.s32.totalorder %s19, 1
      %p36 = por %p34, %p35
      %p37 = scmp.ne.s32.totalorder %s29, %s32
      %p38 = scmp.eq.s32.totalorder %s19, 0
      %p39 = por %p37, %p38
      %p40 = scmp.ne.s32.totalorder %s29, %s32
      %p41 = scmp.eq.s32.totalorder %s24, 1
      %p42 = por %p40, %p41
      %p43 = scmp.ne.s32.totalorder %s32, %s33
      %p44 = scmp.eq.s32.totalorder %s24, 0
      %p45 = por %p43, %p44
      %p46 = scmp.ne.s32.totalorder %s32, %s33
      %p47 = scmp.eq.s32.totalorder %s25, 1
      %p48 = por %p46, %p47
      %p50 = scmp.ne.s32.totalorder %s33, %s49
      %p51 = scmp.eq.s32.totalorder %s25, 0
      %p52 = por %p50, %p51
      %s54 = sadd.s32 %s53, 1
      %p57 = scmp.eq.s32.totalorder %s19, 1
      %p58 = scmp.ne.s32.totalorder %s53, %s55
      %p59 = scmp.eq.s32.totalorder %s19, 0
      %p60 = por %p58, %p59
      %p61 = scmp.ne.s32.totalorder %s53, %s55
      %p62 = scmp.eq.s32.totalorder %s24, 1
      %p63 = por %p61, %p62
      %p64 = scmp.ne.s32.totalorder %s55, %s56
      %p65 = scmp.eq.s32.totalorder %s24, 0
      %p66 = por %p64, %p65
      %p67 = scmp.ne.s32.totalorder %s55, %s56
      %p68 = scmp.eq.s32.totalorder %s25, 1
      %p69 = por %p67, %p68
      %p71 = scmp.ne.s32.totalorder %s56, %s70
      %p72 = scmp.eq.s32.totalorder %s25, 0
      %p73 = por %p71, %p72
      %s75 = sadd.s32 %s74, 1
      %p78 = scmp.eq.s32.totalorder %s19, 1
      %p79 = scmp.ne.s32.totalorder %s74, %s76
      %p80 = scmp.eq.s32.totalorder %s19, 0
      %p81 = por %p79, %p80
      %p82 = scmp.ne.s32.totalorder %s74, %s76
      %p83 = scmp.eq.s32.totalorder %s24, 1
      %p84 = por %p82, %p83
      %p85 = scmp.ne.s32.totalorder %s76, %s77
      %p86 = scmp.eq.s32.totalorder %s24, 0
      %p87 = por %p85, %p86
      %p88 = scmp.ne.s32.totalorder %s76, %s77
      %p89 = scmp.eq.s32.totalorder %s25, 1
      %p90 = por %p88, %p89
      %p92 = scmp.ne.s32.totalorder %s77, %s91
      %p93 = scmp.eq.s32.totalorder %s25, 0
      %p94 = por %p92, %p93
      %s96 = sadd.s32 %s95, 1
      %p99 = scmp.eq.s32.totalorder %s19, 1
      %p100 = scmp.ne.s32.totalorder %s95, %s97
      %p101 = scmp.eq.s32.totalorder %s19, 0
      %p102 = por %p100, %p101
      %p103 = scmp.ne.s32.totalorder %s95, %s97
      %p104 = scmp.eq.s32.totalorder %s24, 1
      %p105 = por %p103, %p104
      %p106 = scmp.ne.s32.totalorder %s97, %s98
      %p107 = scmp.eq.s32.totalorder %s24, 0
      %p108 = por %p106, %p107
      %p109 = scmp.ne.s32.totalorder %s97, %s98
      %p110 = scmp.eq.s32.totalorder %s25, 1
      %p111 = por %p109, %p110
      %p113 = scmp.ne.s32.totalorder %s98, %s112
      %p114 = scmp.eq.s32.totalorder %s25, 0
      %p115 = por %p113, %p114
      %s117 = sadd.s32 %s116, 1
      %p120 = scmp.eq.s32.totalorder %s19, 1
      %p121 = scmp.ne.s32.totalorder %s116, %s118
      %p122 = scmp.eq.s32.totalorder %s19, 0
      %p123 = por %p121, %p122
      %p124 = scmp.ne.s32.totalorder %s116, %s118
      %p125 = scmp.eq.s32.totalorder %s24, 1
      %p126 = por %p124, %p125
      %p127 = scmp.ne.s32.totalorder %s118, %s119
      %p128 = scmp.eq.s32.totalorder %s24, 0
      %p129 = por %p127, %p128
      %p130 = scmp.ne.s32.totalorder %s118, %s119
      %p131 = scmp.eq.s32.totalorder %s25, 1
      %p132 = por %p130, %p131
      %p134 = scmp.ne.s32.totalorder %s119, %s133
      %p135 = scmp.eq.s32.totalorder %s25, 0
      %p136 = por %p134, %p135
      %s138 = sadd.s32 %s137, 1
      %p141 = scmp.eq.s32.totalorder %s19, 1
      %p142 = scmp.ne.s32.totalorder %s137, %s139
      %p143 = scmp.eq.s32.totalorder %s19, 0
      %p144 = por %p142, %p143
      %p145 = scmp.ne.s32.totalorder %s137, %s139
      %p146 = scmp.eq.s32.totalorder %s24, 1
      %p147 = por %p145, %p146
      %p148 = scmp.ne.s32.totalorder %s139, %s140
      %p149 = scmp.eq.s32.totalorder %s24, 0
      %p150 = por %p148, %p149
      %p151 = scmp.ne.s32.totalorder %s139, %s140
      %p152 = scmp.eq.s32.totalorder %s25, 1
      %p153 = por %p151, %p152
      %p155 = scmp.ne.s32.totalorder %s140, %s154
      %p156 = scmp.eq.s32.totalorder %s25, 0
      %p157 = por %p155, %p156
      %s158 = ssub.s32 %s19, %s26
      %p159 = scmp.eq.s32.totalorder %s158, 0
      %s161 = sadd.s32 %s160, 1
      %s162 = scalar_select %p159, %s160, %s161
      %p165 = pneg %p159
      %p166 = scmp.eq.s32.totalorder %s19, 1
      %p167 = por %p165, %p166
      %p168 = scmp.ne.s32.totalorder %s160, %s163
      %p169 = scmp.eq.s32.totalorder %s19, 0
      %p170 = por %p168, %p169
      %p171 = scmp.ne.s32.totalorder %s160, %s163
      %p172 = scmp.eq.s32.totalorder %s24, 1
      %p173 = por %p171, %p172
      %p174 = scmp.ne.s32.totalorder %s163, %s164
      %p175 = scmp.eq.s32.totalorder %s24, 0
      %p176 = por %p174, %p175
      %p177 = scmp.ne.s32.totalorder %s163, %s164
      %p178 = scmp.eq.s32.totalorder %s25, 1
      %p179 = por %p177, %p178
      %p181 = scmp.ne.s32.totalorder %s164, %s180
      %p182 = scmp.eq.s32.totalorder %s25, 0
      %p183 = por %p181, %p182
      %p184 = scmp.le.s32.totalorder 1, %s19
      %p185 = scmp.lt.s32.totalorder %s19, 3
      %p186 = pnand %p184, %p185
      %p187 = pneg %p186
      // Predicated region
      $region9: #{tpu_custom_call.1} parent=5 // pred_check
        _
      $region10: #{tpu_custom_call.1} parent=5 // pred_check_branch
        %189 = sbr.rel (%p186) target = $region12
      $region11: #{tpu_custom_call.1} parent=5 // pred_region
        %s190 = ssub.s32 %s19, 1
        // Predicated region
        $region13: #{tpu_custom_call.1} parent=11 // pred_check
          %p191 = pneg %p66
        $region14: #{tpu_custom_call.1} parent=11 // pred_check_branch
          %193 = sbr.rel (%p191) target = $region16
        $region15: #{tpu_custom_call.1} parent=11 // pred_region
          _
        $region16: #{tpu_custom_call.1} parent=11 // pred_fallthru
          _
        // Predicated region
        $region17: #{tpu_custom_call.1} parent=11 // pred_check
          %p194 = pneg %p87
        $region18: #{tpu_custom_call.1} parent=11 // pred_check_branch
          %196 = sbr.rel (%p194) target = $region20
        $region19: #{tpu_custom_call.1} parent=11 // pred_region
          %s198 = ssub.s32 640, 640
          %199 = vsyncadd [#allocation6], %s198
          %s200 = sshll.u32 [#allocation5], 4
          %s201 = int_to_ptr.vmem [resolvable:$true] %s200
          %206 = dma.hbm_to_vmem [thread:$0]  %s2, 640, %s201, [#allocation6], 128, 128, 8
        $region20: #{tpu_custom_call.1} parent=11 // pred_fallthru
          _
        // Predicated region
        $region21: #{tpu_custom_call.1} parent=11 // pred_check
          %p207 = pneg %p108
        $region22: #{tpu_custom_call.1} parent=11 // pred_check_branch
          %209 = sbr.rel (%p207) target = $region24
        $region23: #{tpu_custom_call.1} parent=11 // pred_region
          _
        $region24: #{tpu_custom_call.1} parent=11 // pred_fallthru
          _
        // Predicated region
        $region25: #{tpu_custom_call.1} parent=11 // pred_check
          %p210 = pneg %p129
        $region26: #{tpu_custom_call.1} parent=11 // pred_check_branch
          %212 = sbr.rel (%p210) target = $region28
        $region27: #{tpu_custom_call.1} parent=11 // pred_region
          _
        $region28: #{tpu_custom_call.1} parent=11 // pred_fallthru
          _
        // Predicated region
        $region29: #{tpu_custom_call.1} parent=11 // pred_check
          %p213 = pneg %p150
        $region30: #{tpu_custom_call.1} parent=11 // pred_check_branch
          %215 = sbr.rel (%p213) target = $region32
        $region31: #{tpu_custom_call.1} parent=11 // pred_region
          _
        $region32: #{tpu_custom_call.1} parent=11 // pred_fallthru
          _
      $region12: #{tpu_custom_call.1} parent=5 // pred_fallthru
        _
      %p216 = scmp.lt.s32.totalorder %s19, 2
      // Predicated region
      $region33: #{tpu_custom_call.1} parent=5 // pred_check
        %p217 = pneg %p216
      $region34: #{tpu_custom_call.1} parent=5 // pred_check_branch
        %219 = sbr.rel (%p217) target = $region36
      $region35: #{tpu_custom_call.1} parent=5 // pred_region
        // Predicated region
        $region37: #{tpu_custom_call.1} parent=35 // pred_check
          %p220 = pneg %p39
        $region38: #{tpu_custom_call.1} parent=35 // pred_check_branch
          %222 = sbr.rel (%p220) target = $region40
        $region39: #{tpu_custom_call.1} parent=35 // pred_region
          %s223 = sand.u32 %s29, 1
          %s224 = scalar_lea.sflag [#allocation3], %s223
          %s225 = sand.u32 %s29, 1
          %s226 = smul.addr %s225, 16
          %s227 = scalar_lea.vmem [#allocation2], %s226
          %s228 = smul.u32 8, %s19
          %s230 = ssub.s32 256, 256
          %231 = vsyncadd %s224, %s230
          %s232 = smul.addr %s228, 32
          %s233 = scalar_lea.hbm %s0, %s232
          %s235 = sshll.u32 %s227, 4
          %s236 = int_to_ptr.vmem [resolvable:$true] %s235
          %238 = dma.hbm_to_vmem [thread:$0]  %s233, 256, %s236, %s224
        $region40: #{tpu_custom_call.1} parent=35 // pred_fallthru
          _
      $region36: #{tpu_custom_call.1} parent=5 // pred_fallthru
        _
      %p239 = scmp.le.s32.totalorder 1, %s19
      %p240 = scmp.lt.s32.totalorder %s19, 3
      %p241 = pnand %p239, %p240
      %p242 = pneg %p241
      // Predicated region
      $region41: #{tpu_custom_call.1} parent=5 // pred_check
        _
      $region42: #{tpu_custom_call.1} parent=5 // pred_check_branch
        %244 = sbr.rel (%p241) target = $region44
      $region43: #{tpu_custom_call.1} parent=5 // pred_region
        %s245 = ssub.s32 %s19, 1
        %s246 = sand.u32 %s32, 1
        %s247 = scalar_lea.sflag [#allocation3], %s246
        %s248 = sand.u32 %s32, 1
        %s249 = smul.addr %s248, 16
        %s250 = scalar_lea.vmem [#allocation2], %s249
        // Predicated region
        $region45: #{tpu_custom_call.1} parent=43 // pred_check
          %p251 = pneg %p45
        $region46: #{tpu_custom_call.1} parent=43 // pred_check_branch
          %253 = sbr.rel (%p251) target = $region48
        $region47: #{tpu_custom_call.1} parent=43 // pred_region
          %254 = dma.done %s247, 256
        $region48: #{tpu_custom_call.1} parent=43 // pred_fallthru
          _
        // Predicated region
        $region49: #{tpu_custom_call.1} parent=43 // pred_check
          %p255 = pneg %p87
        $region50: #{tpu_custom_call.1} parent=43 // pred_check_branch
          %257 = sbr.rel (%p255) target = $region52
        $region51: #{tpu_custom_call.1} parent=43 // pred_region
          %258 = dma.done [#allocation6], 640
        $region52: #{tpu_custom_call.1} parent=43 // pred_fallthru
          _
        %s259 = sand.u32 %s32, 1
        %s260 = scalar_lea.sflag [#allocation3], %s259
        %s261 = sand.u32 %s32, 1
        %s262 = smul.addr %s261, 16
        %s263 = scalar_lea.vmem [#allocation2], %s262
        %p264 = pneg %p45
        %p265 = pneg %p42
        %p266 = pneg %p66
        %p267 = pneg %p63
        %p268 = pneg %p87
        %p269 = pneg %p84
        %p270 = pneg %p108
        %p271 = pneg %p105
        %p272 = pneg %p129
        %p273 = pneg %p126
        %p274 = pneg %p150
        %p275 = pneg %p147
        %p276 = pneg %p176
        %p277 = pneg %p173
        %s278 = sand.u32 %s163, 1
        %s279 = scalar_lea.sflag [#allocation4], %s278
        %s280 = sand.u32 %s163, 1
        %s281 = smul.addr %s280, 64
        %s282 = scalar_lea.vmem [#allocation7], %s281
        %s283 = smul.u32 8, %s24
        %s284 = smul.u32 8, %s24
        %v285 = vld [vmem:[%s250] sm:$0xff]
        %v286 = vld [vmem:[%s250 + $0x8] sm:$0xff]
        %v287 = vlaneseq
        %v288 = vshrl.u32 %v287, 7
        %v289 = vadd.s32 %v288, 8
        %v290 = vadd.s32 %v288, 16
        %v291 = vadd.s32 %v288, 24
        %v292 = vadd.s32 %v288, 32
        %v293 = vadd.s32 %v288, 40
        %v294 = vadd.s32 %v288, 48
        %v295 = vadd.s32 %v288, 56
        %v296 = vlaneseq
        %v297 = vshrl.u32 %v296, 7
        %v298 = vsub.s32 0, %v297
        %v299 = vrot.slane %v285, %v298
        %v300 = vlaneseq
        %v301 = vshrl.u32 %v300, 7
        %v302 = vsub.s32 2, %v301
        %v303 = vrot.slane %v285, %v302
        %v304 = vlaneseq
        %v305 = vshrl.u32 %v304, 7
        %v306 = vsub.s32 4, %v305
        %v307 = vrot.slane %v285, %v306
        %v308 = vlaneseq
        %v309 = vshrl.u32 %v308, 7
        %v310 = vsub.s32 6, %v309
        %v311 = vrot.slane %v285, %v310
        %v312 = vlaneseq
        %v313 = vshrl.u32 %v312, 7
        %v314 = vsub.s32 0, %v313
        %v315 = vrot.slane %v286, %v314
        %v316 = vlaneseq
        %v317 = vshrl.u32 %v316, 7
        %v318 = vsub.s32 2, %v317
        %v319 = vrot.slane %v286, %v318
        %v320 = vlaneseq
        %v321 = vshrl.u32 %v320, 7
        %v322 = vsub.s32 4, %v321
        %v323 = vrot.slane %v286, %v322
        %v324 = vlaneseq
        %v325 = vshrl.u32 %v324, 7
        %v326 = vsub.s32 6, %v325
        %v327 = vrot.slane %v286, %v326
        %v328 = vlaneseq
        %v329 = vshrl.u32 %v328, 7
        %v330 = vsub.s32 0, %v329
        %v331 = vrot.slane %v299, %v330
        %v332 = vlaneseq
        %v333 = vshrl.u32 %v332, 7
        %v334 = vsub.s32 0, %v333
        %v335 = vrot.slane %v303, %v334
        %v336 = vlaneseq
        %v337 = vshrl.u32 %v336, 7
        %v338 = vsub.s32 0, %v337
        %v339 = vrot.slane %v307, %v338
        %v340 = vlaneseq
        %v341 = vshrl.u32 %v340, 7
        %v342 = vsub.s32 0, %v341
        %v343 = vrot.slane %v311, %v342
        %v344 = vlaneseq
        %v345 = vshrl.u32 %v344, 7
        %v346 = vsub.s32 0, %v345
        %v347 = vrot.slane %v315, %v346
        %v348 = vlaneseq
        %v349 = vshrl.u32 %v348, 7
        %v350 = vsub.s32 0, %v349
        %v351 = vrot.slane %v319, %v350
        %v352 = vlaneseq
        %v353 = vshrl.u32 %v352, 7
        %v354 = vsub.s32 0, %v353
        %v355 = vrot.slane %v323, %v354
        %v356 = vlaneseq
        %v357 = vshrl.u32 %v356, 7
        %v358 = vsub.s32 0, %v357
        %v359 = vrot.slane %v327, %v358
        %vm360 = vcmp.eq.s32.totalorder %v288, %v331
        %vm361 = vcmp.eq.s32.totalorder %v288, %v335
        %vm362 = vcmp.eq.s32.totalorder %v288, %v339
        %vm363 = vcmp.eq.s32.totalorder %v288, %v343
        %vm364 = vcmp.eq.s32.totalorder %v288, %v347
        %vm365 = vcmp.eq.s32.totalorder %v288, %v351
        %vm366 = vcmp.eq.s32.totalorder %v288, %v355
        %vm367 = vcmp.eq.s32.totalorder %v288, %v359
        %vm368 = vcmp.eq.s32.totalorder %v289, %v331
        %vm369 = vcmp.eq.s32.totalorder %v289, %v335
        %vm370 = vcmp.eq.s32.totalorder %v289, %v339
        %vm371 = vcmp.eq.s32.totalorder %v289, %v343
        %vm372 = vcmp.eq.s32.totalorder %v289, %v347
        %vm373 = vcmp.eq.s32.totalorder %v289, %v351
        %vm374 = vcmp.eq.s32.totalorder %v289, %v355
        %vm375 = vcmp.eq.s32.totalorder %v289, %v359
        %vm376 = vcmp.eq.s32.totalorder %v290, %v331
        %vm377 = vcmp.eq.s32.totalorder %v290, %v335
        %vm378 = vcmp.eq.s32.totalorder %v290, %v339
        %vm379 = vcmp.eq.s32.totalorder %v290, %v343
        %vm380 = vcmp.eq.s32.totalorder %v290, %v347
        %vm381 = vcmp.eq.s32.totalorder %v290, %v351
        %vm382 = vcmp.eq.s32.totalorder %v290, %v355
        %vm383 = vcmp.eq.s32.totalorder %v290, %v359
        %vm384 = vcmp.eq.s32.totalorder %v291, %v331
        %vm385 = vcmp.eq.s32.totalorder %v291, %v335
        %vm386 = vcmp.eq.s32.totalorder %v291, %v339
        %vm387 = vcmp.eq.s32.totalorder %v291, %v343
        %vm388 = vcmp.eq.s32.totalorder %v291, %v347
        %vm389 = vcmp.eq.s32.totalorder %v291, %v351
        %vm390 = vcmp.eq.s32.totalorder %v291, %v355
        %vm391 = vcmp.eq.s32.totalorder %v291, %v359
        %vm392 = vcmp.eq.s32.totalorder %v292, %v331
        %vm393 = vcmp.eq.s32.totalorder %v292, %v335
        %vm394 = vcmp.eq.s32.totalorder %v292, %v339
        %vm395 = vcmp.eq.s32.totalorder %v292, %v343
        %vm396 = vcmp.eq.s32.totalorder %v292, %v347
        %vm397 = vcmp.eq.s32.totalorder %v292, %v351
        %vm398 = vcmp.eq.s32.totalorder %v292, %v355
        %vm399 = vcmp.eq.s32.totalorder %v292, %v359
        %vm400 = vcmp.eq.s32.totalorder %v293, %v331
        %vm401 = vcmp.eq.s32.totalorder %v293, %v335
        %vm402 = vcmp.eq.s32.totalorder %v293, %v339
        %vm403 = vcmp.eq.s32.totalorder %v293, %v343
        %vm404 = vcmp.eq.s32.totalorder %v293, %v347
        %vm405 = vcmp.eq.s32.totalorder %v293, %v351
        %vm406 = vcmp.eq.s32.totalorder %v293, %v355
        %vm407 = vcmp.eq.s32.totalorder %v293, %v359
        %vm408 = vcmp.eq.s32.totalorder %v294, %v331
        %vm409 = vcmp.eq.s32.totalorder %v294, %v335
        %vm410 = vcmp.eq.s32.totalorder %v294, %v339
        %vm411 = vcmp.eq.s32.totalorder %v294, %v343
        %vm412 = vcmp.eq.s32.totalorder %v294, %v347
        %vm413 = vcmp.eq.s32.totalorder %v294, %v351
        %vm414 = vcmp.eq.s32.totalorder %v294, %v355
        %vm415 = vcmp.eq.s32.totalorder %v294, %v359
        %vm416 = vcmp.eq.s32.totalorder %v295, %v331
        %vm417 = vcmp.eq.s32.totalorder %v295, %v335
        %vm418 = vcmp.eq.s32.totalorder %v295, %v339
        %vm419 = vcmp.eq.s32.totalorder %v295, %v343
        %vm420 = vcmp.eq.s32.totalorder %v295, %v347
        %vm421 = vcmp.eq.s32.totalorder %v295, %v351
        %vm422 = vcmp.eq.s32.totalorder %v295, %v355
        %vm423 = vcmp.eq.s32.totalorder %v295, %v359
        %v424 = vsel %vm360, 1, 0
        %v425 = vsel %vm361, 1, 0
        %v426 = vsel %vm362, 1, 0
        %v427 = vsel %vm363, 1, 0
        %v428 = vsel %vm364, 1, 0
        %v429 = vsel %vm365, 1, 0
        %v430 = vsel %vm366, 1, 0
        %v431 = vsel %vm367, 1, 0
        %v432 = vsel %vm368, 1, 0
        %v433 = vsel %vm369, 1, 0
        %v434 = vsel %vm370, 1, 0
        %v435 = vsel %vm371, 1, 0
        %v436 = vsel %vm372, 1, 0
        %v437 = vsel %vm373, 1, 0
        %v438 = vsel %vm374, 1, 0
        %v439 = vsel %vm375, 1, 0
        %v440 = vsel %vm376, 1, 0
        %v441 = vsel %vm377, 1, 0
        %v442 = vsel %vm378, 1, 0
        %v443 = vsel %vm379, 1, 0
        %v444 = vsel %vm380, 1, 0
        %v445 = vsel %vm381, 1, 0
        %v446 = vsel %vm382, 1, 0
        %v447 = vsel %vm383, 1, 0
        %v448 = vsel %vm384, 1, 0
        %v449 = vsel %vm385, 1, 0
        %v450 = vsel %vm386, 1, 0
        %v451 = vsel %vm387, 1, 0
        %v452 = vsel %vm388, 1, 0
        %v453 = vsel %vm389, 1, 0
        %v454 = vsel %vm390, 1, 0
        %v455 = vsel %vm391, 1, 0
        %v456 = vsel %vm392, 1, 0
        %v457 = vsel %vm393, 1, 0
        %v458 = vsel %vm394, 1, 0
        %v459 = vsel %vm395, 1, 0
        %v460 = vsel %vm396, 1, 0
        %v461 = vsel %vm397, 1, 0
        %v462 = vsel %vm398, 1, 0
        %v463 = vsel %vm399, 1, 0
        %v464 = vsel %vm400, 1, 0
        %v465 = vsel %vm401, 1, 0
        %v466 = vsel %vm402, 1, 0
        %v467 = vsel %vm403, 1, 0
        %v468 = vsel %vm404, 1, 0
        %v469 = vsel %vm405, 1, 0
        %v470 = vsel %vm406, 1, 0
        %v471 = vsel %vm407, 1, 0
        %v472 = vsel %vm408, 1, 0
        %v473 = vsel %vm409, 1, 0
        %v474 = vsel %vm410, 1, 0
        %v475 = vsel %vm411, 1, 0
        %v476 = vsel %vm412, 1, 0
        %v477 = vsel %vm413, 1, 0
        %v478 = vsel %vm414, 1, 0
        %v479 = vsel %vm415, 1, 0
        %v480 = vsel %vm416, 1, 0
        %v481 = vsel %vm417, 1, 0
        %v482 = vsel %vm418, 1, 0
        %v483 = vsel %vm419, 1, 0
        %v484 = vsel %vm420, 1, 0
        %v485 = vsel %vm421, 1, 0
        %v486 = vsel %vm422, 1, 0
        %v487 = vsel %vm423, 1, 0
        %v488 = vcvt.s32.f32 %v424
        %v489 = vcvt.s32.f32 %v425
        %v490 = vcvt.s32.f32 %v426
        %v491 = vcvt.s32.f32 %v427
        %v492 = vcvt.s32.f32 %v428
        %v493 = vcvt.s32.f32 %v429
        %v494 = vcvt.s32.f32 %v430
        %v495 = vcvt.s32.f32 %v431
        %v496 = vcvt.s32.f32 %v432
        %v497 = vcvt.s32.f32 %v433
        %v498 = vcvt.s32.f32 %v434
        %v499 = vcvt.s32.f32 %v435
        %v500 = vcvt.s32.f32 %v436
        %v501 = vcvt.s32.f32 %v437
        %v502 = vcvt.s32.f32 %v438
        %v503 = vcvt.s32.f32 %v439
        %v504 = vcvt.s32.f32 %v440
        %v505 = vcvt.s32.f32 %v441
        %v506 = vcvt.s32.f32 %v442
        %v507 = vcvt.s32.f32 %v443
        %v508 = vcvt.s32.f32 %v444
        %v509 = vcvt.s32.f32 %v445
        %v510 = vcvt.s32.f32 %v446
        %v511 = vcvt.s32.f32 %v447
        %v512 = vcvt.s32.f32 %v448
        %v513 = vcvt.s32.f32 %v449
        %v514 = vcvt.s32.f32 %v450
        %v515 = vcvt.s32.f32 %v451
        %v516 = vcvt.s32.f32 %v452
        %v517 = vcvt.s32.f32 %v453
        %v518 = vcvt.s32.f32 %v454
        %v519 = vcvt.s32.f32 %v455
        %v520 = vcvt.s32.f32 %v456
        %v521 = vcvt.s32.f32 %v457
        %v522 = vcvt.s32.f32 %v458
        %v523 = vcvt.s32.f32 %v459
        %v524 = vcvt.s32.f32 %v460
        %v525 = vcvt.s32.f32 %v461
        %v526 = vcvt.s32.f32 %v462
        %v527 = vcvt.s32.f32 %v463
        %v528 = vcvt.s32.f32 %v464
        %v529 = vcvt.s32.f32 %v465
        %v530 = vcvt.s32.f32 %v466
        %v531 = vcvt.s32.f32 %v467
        %v532 = vcvt.s32.f32 %v468
        %v533 = vcvt.s32.f32 %v469
        %v534 = vcvt.s32.f32 %v470
        %v535 = vcvt.s32.f32 %v471
        %v536 = vcvt.s32.f32 %v472
        %v537 = vcvt.s32.f32 %v473
        %v538 = vcvt.s32.f32 %v474
        %v539 = vcvt.s32.f32 %v475
        %v540 = vcvt.s32.f32 %v476
        %v541 = vcvt.s32.f32 %v477
        %v542 = vcvt.s32.f32 %v478
        %v543 = vcvt.s32.f32 %v479
        %v544 = vcvt.s32.f32 %v480
        %v545 = vcvt.s32.f32 %v481
        %v546 = vcvt.s32.f32 %v482
        %v547 = vcvt.s32.f32 %v483
        %v548 = vcvt.s32.f32 %v484
        %v549 = vcvt.s32.f32 %v485
        %v550 = vcvt.s32.f32 %v486
        %v551 = vcvt.s32.f32 %v487
        %v552 = vlaneseq
        %v553 = vshrl.u32 %v552, 7
        %v554 = vsub.s32 1, %v553
        %v555 = vrot.slane %v285, %v554
        %v556 = vlaneseq
        %v557 = vshrl.u32 %v556, 7
        %v558 = vsub.s32 3, %v557
        %v559 = vrot.slane %v285, %v558
        %v560 = vlaneseq
        %v561 = vshrl.u32 %v560, 7
        %v562 = vsub.s32 5, %v561
        %v563 = vrot.slane %v285, %v562
        %v564 = vlaneseq
        %v565 = vshrl.u32 %v564, 7
        %v566 = vsub.s32 7, %v565
        %v567 = vrot.slane %v285, %v566
        %v568 = vlaneseq
        %v569 = vshrl.u32 %v568, 7
        %v570 = vsub.s32 1, %v569
        %v571 = vrot.slane %v286, %v570
        %v572 = vlaneseq
        %v573 = vshrl.u32 %v572, 7
        %v574 = vsub.s32 3, %v573
        %v575 = vrot.slane %v286, %v574
        %v576 = vlaneseq
        %v577 = vshrl.u32 %v576, 7
        %v578 = vsub.s32 5, %v577
        %v579 = vrot.slane %v286, %v578
        %v580 = vlaneseq
        %v581 = vshrl.u32 %v580, 7
        %v582 = vsub.s32 7, %v581
        %v583 = vrot.slane %v286, %v582
        %v584 = vlaneseq
        %v585 = vshrl.u32 %v584, 7
        %v586 = vsub.s32 1, %v585
        %v587 = vrot.slane %v555, %v586
        %v588 = vlaneseq
        %v589 = vshrl.u32 %v588, 7
        %v590 = vsub.s32 1, %v589
        %v591 = vrot.slane %v559, %v590
        %v592 = vlaneseq
        %v593 = vshrl.u32 %v592, 7
        %v594 = vsub.s32 1, %v593
        %v595 = vrot.slane %v563, %v594
        %v596 = vlaneseq
        %v597 = vshrl.u32 %v596, 7
        %v598 = vsub.s32 1, %v597
        %v599 = vrot.slane %v567, %v598
        %v600 = vlaneseq
        %v601 = vshrl.u32 %v600, 7
        %v602 = vsub.s32 1, %v601
        %v603 = vrot.slane %v571, %v602
        %v604 = vlaneseq
        %v605 = vshrl.u32 %v604, 7
        %v606 = vsub.s32 1, %v605
        %v607 = vrot.slane %v575, %v606
        %v608 = vlaneseq
        %v609 = vshrl.u32 %v608, 7
        %v610 = vsub.s32 1, %v609
        %v611 = vrot.slane %v579, %v610
        %v612 = vlaneseq
        %v613 = vshrl.u32 %v612, 7
        %v614 = vsub.s32 1, %v613
        %v615 = vrot.slane %v583, %v614
        %vm616 = vcmp.eq.s32.totalorder %v288, %v587
        %vm617 = vcmp.eq.s32.totalorder %v288, %v591
        %vm618 = vcmp.eq.s32.totalorder %v288, %v595
        %vm619 = vcmp.eq.s32.totalorder %v288, %v599
        %vm620 = vcmp.eq.s32.totalorder %v288, %v603
        %vm621 = vcmp.eq.s32.totalorder %v288, %v607
        %vm622 = vcmp.eq.s32.totalorder %v288, %v611
        %vm623 = vcmp.eq.s32.totalorder %v288, %v615
        %vm624 = vcmp.eq.s32.totalorder %v289, %v587
        %vm625 = vcmp.eq.s32.totalorder %v289, %v591
        %vm626 = vcmp.eq.s32.totalorder %v289, %v595
        %vm627 = vcmp.eq.s32.totalorder %v289, %v599
        %vm628 = vcmp.eq.s32.totalorder %v289, %v603
        %vm629 = vcmp.eq.s32.totalorder %v289, %v607
        %vm630 = vcmp.eq.s32.totalorder %v289, %v611
        %vm631 = vcmp.eq.s32.totalorder %v289, %v615
        %vm632 = vcmp.eq.s32.totalorder %v290, %v587
        %vm633 = vcmp.eq.s32.totalorder %v290, %v591
        %vm634 = vcmp.eq.s32.totalorder %v290, %v595
        %vm635 = vcmp.eq.s32.totalorder %v290, %v599
        %vm636 = vcmp.eq.s32.totalorder %v290, %v603
        %vm637 = vcmp.eq.s32.totalorder %v290, %v607
        %vm638 = vcmp.eq.s32.totalorder %v290, %v611
        %vm639 = vcmp.eq.s32.totalorder %v290, %v615
        %vm640 = vcmp.eq.s32.totalorder %v291, %v587
        %vm641 = vcmp.eq.s32.totalorder %v291, %v591
        %vm642 = vcmp.eq.s32.totalorder %v291, %v595
        %vm643 = vcmp.eq.s32.totalorder %v291, %v599
        %vm644 = vcmp.eq.s32.totalorder %v291, %v603
        %vm645 = vcmp.eq.s32.totalorder %v291, %v607
        %vm646 = vcmp.eq.s32.totalorder %v291, %v611
        %vm647 = vcmp.eq.s32.totalorder %v291, %v615
        %vm648 = vcmp.eq.s32.totalorder %v292, %v587
        %vm649 = vcmp.eq.s32.totalorder %v292, %v591
        %vm650 = vcmp.eq.s32.totalorder %v292, %v595
        %vm651 = vcmp.eq.s32.totalorder %v292, %v599
        %vm652 = vcmp.eq.s32.totalorder %v292, %v603
        %vm653 = vcmp.eq.s32.totalorder %v292, %v607
        %vm654 = vcmp.eq.s32.totalorder %v292, %v611
        %vm655 = vcmp.eq.s32.totalorder %v292, %v615
        %vm656 = vcmp.eq.s32.totalorder %v293, %v587
        %vm657 = vcmp.eq.s32.totalorder %v293, %v591
        %vm658 = vcmp.eq.s32.totalorder %v293, %v595
        %vm659 = vcmp.eq.s32.totalorder %v293, %v599
        %vm660 = vcmp.eq.s32.totalorder %v293, %v603
        %vm661 = vcmp.eq.s32.totalorder %v293, %v607
        %vm662 = vcmp.eq.s32.totalorder %v293, %v611
        %vm663 = vcmp.eq.s32.totalorder %v293, %v615
        %vm664 = vcmp.eq.s32.totalorder %v294, %v587
        %vm665 = vcmp.eq.s32.totalorder %v294, %v591
        %vm666 = vcmp.eq.s32.totalorder %v294, %v595
        %vm667 = vcmp.eq.s32.totalorder %v294, %v599
        %vm668 = vcmp.eq.s32.totalorder %v294, %v603
        %vm669 = vcmp.eq.s32.totalorder %v294, %v607
        %vm670 = vcmp.eq.s32.totalorder %v294, %v611
        %vm671 = vcmp.eq.s32.totalorder %v294, %v615
        %vm672 = vcmp.eq.s32.totalorder %v295, %v587
        %vm673 = vcmp.eq.s32.totalorder %v295, %v591
        %vm674 = vcmp.eq.s32.totalorder %v295, %v595
        %vm675 = vcmp.eq.s32.totalorder %v295, %v599
        %vm676 = vcmp.eq.s32.totalorder %v295, %v603
        %vm677 = vcmp.eq.s32.totalorder %v295, %v607
        %vm678 = vcmp.eq.s32.totalorder %v295, %v611
        %vm679 = vcmp.eq.s32.totalorder %v295, %v615
        %v680 = vsel %vm616, 1, 0
        %v681 = vsel %vm617, 1, 0
        %v682 = vsel %vm618, 1, 0
        %v683 = vsel %vm619, 1, 0
        %v684 = vsel %vm620, 1, 0
        %v685 = vsel %vm621, 1, 0
        %v686 = vsel %vm622, 1, 0
        %v687 = vsel %vm623, 1, 0
        %v688 = vsel %vm624, 1, 0
        %v689 = vsel %vm625, 1, 0
        %v690 = vsel %vm626, 1, 0
        %v691 = vsel %vm627, 1, 0
        %v692 = vsel %vm628, 1, 0
        %v693 = vsel %vm629, 1, 0
        %v694 = vsel %vm630, 1, 0
        %v695 = vsel %vm631, 1, 0
        %v696 = vsel %vm632, 1, 0
        %v697 = vsel %vm633, 1, 0
        %v698 = vsel %vm634, 1, 0
        %v699 = vsel %vm635, 1, 0
        %v700 = vsel %vm636, 1, 0
        %v701 = vsel %vm637, 1, 0
        %v702 = vsel %vm638, 1, 0
        %v703 = vsel %vm639, 1, 0
        %v704 = vsel %vm640, 1, 0
        %v705 = vsel %vm641, 1, 0
        %v706 = vsel %vm642, 1, 0
        %v707 = vsel %vm643, 1, 0
        %v708 = vsel %vm644, 1, 0
        %v709 = vsel %vm645, 1, 0
        %v710 = vsel %vm646, 1, 0
        %v711 = vsel %vm647, 1, 0
        %v712 = vsel %vm648, 1, 0
        %v713 = vsel %vm649, 1, 0
        %v714 = vsel %vm650, 1, 0
        %v715 = vsel %vm651, 1, 0
        %v716 = vsel %vm652, 1, 0
        %v717 = vsel %vm653, 1, 0
        %v718 = vsel %vm654, 1, 0
        %v719 = vsel %vm655, 1, 0
        %v720 = vsel %vm656, 1, 0
        %v721 = vsel %vm657, 1, 0
        %v722 = vsel %vm658, 1, 0
        %v723 = vsel %vm659, 1, 0
        %v724 = vsel %vm660, 1, 0
        %v725 = vsel %vm661, 1, 0
        %v726 = vsel %vm662, 1, 0
        %v727 = vsel %vm663, 1, 0
        %v728 = vsel %vm664, 1, 0
        %v729 = vsel %vm665, 1, 0
        %v730 = vsel %vm666, 1, 0
        %v731 = vsel %vm667, 1, 0
        %v732 = vsel %vm668, 1, 0
        %v733 = vsel %vm669, 1, 0
        %v734 = vsel %vm670, 1, 0
        %v735 = vsel %vm671, 1, 0
        %v736 = vsel %vm672, 1, 0
        %v737 = vsel %vm673, 1, 0
        %v738 = vsel %vm674, 1, 0
        %v739 = vsel %vm675, 1, 0
        %v740 = vsel %vm676, 1, 0
        %v741 = vsel %vm677, 1, 0
        %v742 = vsel %vm678, 1, 0
        %v743 = vsel %vm679, 1, 0
        %v744 = vcvt.s32.f32 %v680
        %v745 = vcvt.s32.f32 %v681
        %v746 = vcvt.s32.f32 %v682
        %v747 = vcvt.s32.f32 %v683
        %v748 = vcvt.s32.f32 %v684
        %v749 = vcvt.s32.f32 %v685
        %v750 = vcvt.s32.f32 %v686
        %v751 = vcvt.s32.f32 %v687
        %v752 = vcvt.s32.f32 %v688
        %v753 = vcvt.s32.f32 %v689
        %v754 = vcvt.s32.f32 %v690
        %v755 = vcvt.s32.f32 %v691
        %v756 = vcvt.s32.f32 %v692
        %v757 = vcvt.s32.f32 %v693
        %v758 = vcvt.s32.f32 %v694
        %v759 = vcvt.s32.f32 %v695
        %v760 = vcvt.s32.f32 %v696
        %v761 = vcvt.s32.f32 %v697
        %v762 = vcvt.s32.f32 %v698
        %v763 = vcvt.s32.f32 %v699
        %v764 = vcvt.s32.f32 %v700
        %v765 = vcvt.s32.f32 %v701
        %v766 = vcvt.s32.f32 %v702
        %v767 = vcvt.s32.f32 %v703
        %v768 = vcvt.s32.f32 %v704
        %v769 = vcvt.s32.f32 %v705
        %v770 = vcvt.s32.f32 %v706
        %v771 = vcvt.s32.f32 %v707
        %v772 = vcvt.s32.f32 %v708
        %v773 = vcvt.s32.f32 %v709
        %v774 = vcvt.s32.f32 %v710
        %v775 = vcvt.s32.f32 %v711
        %v776 = vcvt.s32.f32 %v712
        %v777 = vcvt.s32.f32 %v713
        %v778 = vcvt.s32.f32 %v714
        %v779 = vcvt.s32.f32 %v715
        %v780 = vcvt.s32.f32 %v716
        %v781 = vcvt.s32.f32 %v717
        %v782 = vcvt.s32.f32 %v718
        %v783 = vcvt.s32.f32 %v719
        %v784 = vcvt.s32.f32 %v720
        %v785 = vcvt.s32.f32 %v721
        %v786 = vcvt.s32.f32 %v722
        %v787 = vcvt.s32.f32 %v723
        %v788 = vcvt.s32.f32 %v724
        %v789 = vcvt.s32.f32 %v725
        %v790 = vcvt.s32.f32 %v726
        %v791 = vcvt.s32.f32 %v727
        %v792 = vcvt.s32.f32 %v728
        %v793 = vcvt.s32.f32 %v729
        %v794 = vcvt.s32.f32 %v730
        %v795 = vcvt.s32.f32 %v731
        %v796 = vcvt.s32.f32 %v732
        %v797 = vcvt.s32.f32 %v733
        %v798 = vcvt.s32.f32 %v734
        %v799 = vcvt.s32.f32 %v735
        %v800 = vcvt.s32.f32 %v736
        %v801 = vcvt.s32.f32 %v737
        %v802 = vcvt.s32.f32 %v738
        %v803 = vcvt.s32.f32 %v739
        %v804 = vcvt.s32.f32 %v740
        %v805 = vcvt.s32.f32 %v741
        %v806 = vcvt.s32.f32 %v742
        %v807 = vcvt.s32.f32 %v743
        %v808 = vld [vmem:[%s1] sm:$0xff]
        %v809 = vld [vmem:[%s1 + $0x8] sm:$0xff]
        %v810 = vld [vmem:[%s1 + $0x10] sm:$0xff]
        %v811 = vld [vmem:[%s1 + $0x18] sm:$0xff]
        %v812 = vld [vmem:[%s1 + $0x20] sm:$0xff]
        %vm813 = vcmask 523264
        %v815 = vsel %vm813, %v808, 0
        %v818 = vsel %vm813, %v809, 0
        %v821 = vsel %vm813, %v810, 0
        %v824 = vsel %vm813, %v811, 0
        %v827 = vsel %vm813, %v812, 0
        %829 = vmatprep.subr.mxu0 %v745
        %830 = vmatpush1.msra.mxu0 %v744
        %831 = vmatprep.subr.mxu0 %v753
        %832 = vmatpush1.msra.mxu0 %v752
        %833 = vmatprep.subr.mxu0 %v761
        %834 = vmatpush1.msra.mxu0 %v760
        %835 = vmatprep.subr.mxu0 %v769
        %836 = vmatpush1.msra.mxu0 %v768
        %837 = vmatprep.subr.mxu0 %v777
        %838 = vmatpush1.msra.mxu0 %v776
        %839 = vmatprep.subr.mxu0 %v785
        %840 = vmatpush1.msra.mxu0 %v784
        %841 = vmatprep.subr.mxu0 %v793
        %842 = vmatpush1.msra.mxu0 %v792
        %843 = vmatprep.subr.mxu0 %v801
        %844 = vmatpush1.msra.mxu0 %v800
        %845 = vmatprep.subr.mxu0 0.0
        %846 = vmatpush1.msra.mxu0 0.0
        %847 = vmatprep.subr.mxu0 0.0
        %848 = vmatpush1.msra.mxu0 0.0
        %849 = vmatprep.subr.mxu0 0.0
        %850 = vmatpush1.msra.mxu0 0.0
        %851 = vmatprep.subr.mxu0 0.0
        %852 = vmatpush1.msra.mxu0 0.0
        %853 = vmatprep.subr.mxu0 0.0
        %854 = vmatpush1.msra.mxu0 0.0
        %855 = vmatprep.subr.mxu0 0.0
        %856 = vmatpush1.msra.mxu0 0.0
        %857 = vmatprep.subr.mxu0 0.0
        %858 = vmatpush1.msra.mxu0 0.0
        %859 = vmatprep.subr.mxu0 0.0
        %860 = vmatpush1.msra.mxu0 0.0
        %861 = vmatprep.subr.mxu0 0.0
        %862 = vmatpush1.msra.mxu0 0.0
        %863 = vmatprep.subr.mxu0 0.0
        %864 = vmatpush1.msra.mxu0 0.0
        %865 = vmatprep.subr.mxu0 0.0
        %866 = vmatpush1.msra.mxu0 0.0
        %867 = vmatprep.subr.mxu0 0.0
        %868 = vmatpush1.msra.mxu0 0.0
        %869 = vmatprep.subr.mxu0 0.0
        %870 = vmatpush1.msra.mxu0 0.0
        %871 = vmatprep.subr.mxu0 0.0
        %872 = vmatpush1.msra.mxu0 0.0
        %873 = vmatprep.subr.mxu0 0.0
        %874 = vmatpush1.msra.mxu0 0.0
        %875 = vmatprep.subr.mxu0 0.0
        %876 = vmatpush1.msra.mxu0 0.0
        %877 = vmatprep.subr.mxu0 0.0
        %878 = vmatpush1.msra.mxu0 0.0
        %879 = vmatprep.subr.mxu0 0.0
        %880 = vmatpush1.msra.mxu0 0.0
        %881 = vmatprep.subr.mxu0 0.0
        %882 = vmatpush1.msra.mxu0 0.0
        %883 = vmatprep.subr.mxu0 0.0
        %884 = vmatpush1.msra.mxu0 0.0
        %885 = vmatprep.subr.mxu0 0.0
        %886 = vmatpush1.msra.mxu0 0.0
        %887 = vmatprep.subr.mxu0 0.0
        %888 = vmatpush1.msra.mxu0 0.0
        %889 = vmatprep.subr.mxu0 0.0
        %890 = vmatpush1.msra.mxu0 0.0
        %891 = vmatprep.subr.mxu0 0.0
        %892 = vmatpush1.msra.mxu0 0.0
        %893 = vmatprep.mubr.f32.mxu0 0.0
        %894 = vmatmul.mubr.f32.gmra.mrb[0].mxu0 %v815
        %v895 = vpop.f32.mrb[0].mxu0
        %v896 = vadd.f32 0.0, %v895
        %v897 = vpop.f32.mrb[0].mxu0
        %v898 = vadd.f32 0.0, %v897
        %899 = vmatprep.mubr.f32.mxu0 0.0
        %900 = vmatmul.mubr.f32.gmra.mrb[0].mxu0 %v818
        %v901 = vpop.f32.mrb[0].mxu0
        %v902 = vadd.f32 0.0, %v901
        %v903 = vpop.f32.mrb[0].mxu0
        %v904 = vadd.f32 0.0, %v903
        %905 = vmatprep.mubr.f32.mxu0 0.0
        %906 = vmatmul.mubr.f32.gmra.mrb[0].mxu0 %v821
        %v907 = vpop.f32.mrb[0].mxu0
        %v908 = vadd.f32 0.0, %v907
        %v909 = vpop.f32.mrb[0].mxu0
        %v910 = vadd.f32 0.0, %v909
        %911 = vmatprep.mubr.f32.mxu0 0.0
        %912 = vmatmul.mubr.f32.gmra.mrb[0].mxu0 %v824
        %v913 = vpop.f32.mrb[0].mxu0
        %v914 = vadd.f32 0.0, %v913
        %v915 = vpop.f32.mrb[0].mxu0
        %v916 = vadd.f32 0.0, %v915
        %917 = vmatprep.mubr.f32.mxu0 0.0
        %918 = vmatmul.mubr.f32.gmra.mrb[0].mxu0 %v827
        %v919 = vpop.f32.mrb[0].mxu0
        %v920 = vadd.f32 0.0, %v919
        %v921 = vpop.f32.mrb[0].mxu0
        %v922 = vadd.f32 0.0, %v921
        %923 = vdwg.mxu0
        %924 = vmatprep.subr.mxu0 %v747
        %925 = vmatpush1.msra.mxu0 %v746
        %926 = vmatprep.subr.mxu0 %v755
        %927 = vmatpush1.msra.mxu0 %v754
        %928 = vmatprep.subr.mxu0 %v763
        %929 = vmatpush1.msra.mxu0 %v762
        %930 = vmatprep.subr.mxu0 %v771
        %931 = vmatpush1.msra.mxu0 %v770
        %932 = vmatprep.subr.mxu0 %v779
        %933 = vmatpush1.msra.mxu0 %v778
        %934 = vmatprep.subr.mxu0 %v787
        %935 = vmatpush1.msra.mxu0 %v786
        %936 = vmatprep.subr.mxu0 %v795
        %937 = vmatpush1.msra.mxu0 %v794
        %938 = vmatprep.subr.mxu0 %v803
        %939 = vmatpush1.msra.mxu0 %v802
        %940 = vmatprep.subr.mxu0 0.0
        %941 = vmatpush1.msra.mxu0 0.0
        %942 = vmatprep.subr.mxu0 0.0
        %943 = vmatpush1.msra.mxu0 0.0
        %944 = vmatprep.subr.mxu0 0.0
        %945 = vmatpush1.msra.mxu0 0.0
        %946 = vmatprep.subr.mxu0 0.0
        %947 = vmatpush1.msra.mxu0 0.0
        %948 = vmatprep.subr.mxu0 0.0
        %949 = vmatpush1.msra.mxu0 0.0
        %950 = vmatprep.subr.mxu0 0.0
        %951 = vmatpush1.msra.mxu0 0.0
        %952 = vmatprep.subr.mxu0 0.0
        %953 = vmatpush1.msra.mxu0 0.0
        %954 = vmatprep.subr.mxu0 0.0
        %955 = vmatpush1.msra.mxu0 0.0
        %956 = vmatprep.subr.mxu0 0.0
        %957 = vmatpush1.msra.mxu0 0.0
        %958 = vmatprep.subr.mxu0 0.0
        %959 = vmatpush1.msra.mxu0 0.0
        %960 = vmatprep.subr.mxu0 0.0
        %961 = vmatpush1.msra.mxu0 0.0
        %962 = vmatprep.subr.mxu0 0.0
        %963 = vmatpush1.msra.mxu0 0.0
        %964 = vmatprep.subr.mxu0 0.0
        %965 = vmatpush1.msra.mxu0 0.0
        %966 = vmatprep.subr.mxu0 0.0
        %967 = vmatpush1.msra.mxu0 0.0
        %968 = vmatprep.subr.mxu0 0.0
        %969 = vmatpush1.msra.mxu0 0.0
        %970 = vmatprep.subr.mxu0 0.0
        %971 = vmatpush1.msra.mxu0 0.0
        %972 = vmatprep.subr.mxu0 0.0
        %973 = vmatpush1.msra.mxu0 0.0
        %974 = vmatprep.subr.mxu0 0.0
        %975 = vmatpush1.msra.mxu0 0.0
        %976 = vmatprep.subr.mxu0 0.0
        %977 = vmatpush1.msra.mxu0 0.0
        %978 = vmatprep.subr.mxu0 0.0
        %979 = vmatpush1.msra.mxu0 0.0
        %980 = vmatprep.subr.mxu0 0.0
        %981 = vmatpush1.msra.mxu0 0.0
        %982 = vmatprep.subr.mxu0 0.0
        %983 = vmatpush1.msra.mxu0 0.0
        %984 = vmatprep.subr.mxu0 0.0
        %985 = vmatpush1.msra.mxu0 0.0
        %986 = vmatprep.subr.mxu0 0.0
        %987 = vmatpush1.msra.mxu0 0.0
        %988 = vmatprep.mubr.f32.mxu0 0.0
        %989 = vmatmul.mubr.f32.gmra.mrb[0].mxu0 %v815
        %v990 = vpop.f32.mrb[0].mxu0
        %v991 = vadd.f32 0.0, %v990
        %v992 = vpop.f32.mrb[0].mxu0
        %v993 = vadd.f32 0.0, %v992
        %994 = vmatprep.mubr.f32.mxu0 0.0
        %995 = vmatmul.mubr.f32.gmra.mrb[0].mxu0 %v818
        %v996 = vpop.f32.mrb[0].mxu0
        %v997 = vadd.f32 0.0, %v996
        %v998 = vpop.f32.mrb[0].mxu0
        %v999 = vadd.f32 0.0, %v998
        %1000 = vmatprep.mubr.f32.mxu0 0.0
        %1001 = vmatmul.mubr.f32.gmra.mrb[0].mxu0 %v821
        %v1002 = vpop.f32.mrb[0].mxu0
        %v1003 = vadd.f32 0.0, %v1002
        %v1004 = vpop.f32.mrb[0].mxu0
        %v1005 = vadd.f32 0.0, %v1004
        %1006 = vmatprep.mubr.f32.mxu0 0.0
        %1007 = vmatmul.mubr.f32.gmra.mrb[0].mxu0 %v824
        %v1008 = vpop.f32.mrb[0].mxu0
        %v1009 = vadd.f32 0.0, %v1008
        %v1010 = vpop.f32.mrb[0].mxu0
        %v1011 = vadd.f32 0.0, %v1010
        %1012 = vmatprep.mubr.f32.mxu0 0.0
        %1013 = vmatmul.mubr.f32.gmra.mrb[0].mxu0 %v827
        %v1014 = vpop.f32.mrb[0].mxu0
        %v1015 = vadd.f32 0.0, %v1014
        %v1016 = vpop.f32.mrb[0].mxu0
        %v1017 = vadd.f32 0.0, %v1016
        %1018 = vdwg.mxu0
        %1019 = vmatprep.subr.mxu0 %v749
        %1020 = vmatpush1.msra.mxu0 %v748
        %1021 = vmatprep.subr.mxu0 %v757
        %1022 = vmatpush1.msra.mxu0 %v756
        %1023 = vmatprep.subr.mxu0 %v765
        %1024 = vmatpush1.msra.mxu0 %v764
        %1025 = vmatprep.subr.mxu0 %v773
        %1026 = vmatpush1.msra.mxu0 %v772
        %1027 = vmatprep.subr.mxu0 %v781
        %1028 = vmatpush1.msra.mxu0 %v780
        %1029 = vmatprep.subr.mxu0 %v789
        %1030 = vmatpush1.msra.mxu0 %v788
        %1031 = vmatprep.subr.mxu0 %v797
        %1032 = vmatpush1.msra.mxu0 %v796
        %1033 = vmatprep.subr.mxu0 %v805
        %1034 = vmatpush1.msra.mxu0 %v804
        %1035 = vmatprep.subr.mxu0 0.0
        %1036 = vmatpush1.msra.mxu0 0.0
        %1037 = vmatprep.subr.mxu0 0.0
        %1038 = vmatpush1.msra.mxu0 0.0
        %1039 = vmatprep.subr.mxu0 0.0
        %1040 = vmatpush1.msra.mxu0 0.0
        %1041 = vmatprep.subr.mxu0 0.0
        %1042 = vmatpush1.msra.mxu0 0.0
        %1043 = vmatprep.subr.mxu0 0.0
        %1044 = vmatpush1.msra.mxu0 0.0
        %1045 = vmatprep.subr.mxu0 0.0
        %1046 = vmatpush1.msra.mxu0 0.0
        %1047 = vmatprep.subr.mxu0 0.0
        %1048 = vmatpush1.msra.mxu0 0.0
        %1049 = vmatprep.subr.mxu0 0.0
        %1050 = vmatpush1.msra.mxu0 0.0
        %1051 = vmatprep.subr.mxu0 0.0
        %1052 = vmatpush1.msra.mxu0 0.0
        %1053 = vmatprep.subr.mxu0 0.0
        %1054 = vmatpush1.msra.mxu0 0.0
        %1055 = vmatprep.subr.mxu0 0.0
        %1056 = vmatpush1.msra.mxu0 0.0
        %1057 = vmatprep.subr.mxu0 0.0
        %1058 = vmatpush1.msra.mxu0 0.0
        %1059 = vmatprep.subr.mxu0 0.0
        %1060 = vmatpush1.msra.mxu0 0.0
        %1061 = vmatprep.subr.mxu0 0.0
        %1062 = vmatpush1.msra.mxu0 0.0
        %1063 = vmatprep.subr.mxu0 0.0
        %1064 = vmatpush1.msra.mxu0 0.0
        %1065 = vmatprep.subr.mxu0 0.0
        %1066 = vmatpush1.msra.mxu0 0.0
        %1067 = vmatprep.subr.mxu0 0.0
        %1068 = vmatpush1.msra.mxu0 0.0
        %1069 = vmatprep.subr.mxu0 0.0
        %1070 = vmatpush1.msra.mxu0 0.0
        %1071 = vmatprep.subr.mxu0 0.0
        %1072 = vmatpush1.msra.mxu0 0.0
        %1073 = vmatprep.subr.mxu0 0.0
        %1074 = vmatpush1.msra.mxu0 0.0
        %1075 = vmatprep.subr.mxu0 0.0
        %1076 = vmatpush1.msra.mxu0 0.0
        %1077 = vmatprep.subr.mxu0 0.0
        %1078 = vmatpush1.msra.mxu0 0.0
        %1079 = vmatprep.subr.mxu0 0.0
        %1080 = vmatpush1.msra.mxu0 0.0
        %1081 = vmatprep.subr.mxu0 0.0
        %1082 = vmatpush1.msra.mxu0 0.0
        %1083 = vmatprep.mubr.f32.mxu0 0.0
        %1084 = vmatmul.mubr.f32.gmra.mrb[0].mxu0 %v815
        %v1085 = vpop.f32.mrb[0].mxu0
        %v1086 = vadd.f32 0.0, %v1085
        %v1087 = vpop.f32.mrb[0].mxu0
        %v1088 = vadd.f32 0.0, %v1087
        %1089 = vmatprep.mubr.f32.mxu0 0.0
        %1090 = vmatmul.mubr.f32.gmra.mrb[0].mxu0 %v818
        %v1091 = vpop.f32.mrb[0].mxu0
        %v1092 = vadd.f32 0.0, %v1091
        %v1093 = vpop.f32.mrb[0].mxu0
        %v1094 = vadd.f32 0.0, %v1093
        %1095 = vmatprep.mubr.f32.mxu0 0.0
        %1096 = vmatmul.mubr.f32.gmra.mrb[0].mxu0 %v821
        %v1097 = vpop.f32.mrb[0].mxu0
        %v1098 = vadd.f32 0.0, %v1097
        %v1099 = vpop.f32.mrb[0].mxu0
        %v1100 = vadd.f32 0.0, %v1099
        %1101 = vmatprep.mubr.f32.mxu0 0.0
        %1102 = vmatmul.mubr.f32.gmra.mrb[0].mxu0 %v824
        %v1103 = vpop.f32.mrb[0].mxu0
        %v1104 = vadd.f32 0.0, %v1103
        %v1105 = vpop.f32.mrb[0].mxu0
        %v1106 = vadd.f32 0.0, %v1105
        %1107 = vmatprep.mubr.f32.mxu0 0.0
        %1108 = vmatmul.mubr.f32.gmra.mrb[0].mxu0 %v827
        %v1109 = vpop.f32.mrb[0].mxu0
        %v1110 = vadd.f32 0.0, %v1109
        %v1111 = vpop.f32.mrb[0].mxu0
        %v1112 = vadd.f32 0.0, %v1111
        %1113 = vdwg.mxu0
        %1114 = vmatprep.subr.mxu0 %v751
        %1115 = vmatpush1.msra.mxu0 %v750
        %1116 = vmatprep.subr.mxu0 %v759
        %1117 = vmatpush1.msra.mxu0 %v758
        %1118 = vmatprep.subr.mxu0 %v767
        %1119 = vmatpush1.msra.mxu0 %v766
        %1120 = vmatprep.subr.mxu0 %v775
        %1121 = vmatpush1.msra.mxu0 %v774
        %1122 = vmatprep.subr.mxu0 %v783
        %1123 = vmatpush1.msra.mxu0 %v782
        %1124 = vmatprep.subr.mxu0 %v791
        %1125 = vmatpush1.msra.mxu0 %v790
        %1126 = vmatprep.subr.mxu0 %v799
        %1127 = vmatpush1.msra.mxu0 %v798
        %1128 = vmatprep.subr.mxu0 %v807
        %1129 = vmatpush1.msra.mxu0 %v806
        %1130 = vmatprep.subr.mxu0 0.0
        %1131 = vmatpush1.msra.mxu0 0.0
        %1132 = vmatprep.subr.mxu0 0.0
        %1133 = vmatpush1.msra.mxu0 0.0
        %1134 = vmatprep.subr.mxu0 0.0
        %1135 = vmatpush1.msra.mxu0 0.0
        %1136 = vmatprep.subr.mxu0 0.0
        %1137 = vmatpush1.msra.mxu0 0.0
        %1138 = vmatprep.subr.mxu0 0.0
        %1139 = vmatpush1.msra.mxu0 0.0
        %1140 = vmatprep.subr.mxu0 0.0
        %1141 = vmatpush1.msra.mxu0 0.0
        %1142 = vmatprep.subr.mxu0 0.0
        %1143 = vmatpush1.msra.mxu0 0.0
        %1144 = vmatprep.subr.mxu0 0.0
        %1145 = vmatpush1.msra.mxu0 0.0
        %1146 = vmatprep.subr.mxu0 0.0
        %1147 = vmatpush1.msra.mxu0 0.0
        %1148 = vmatprep.subr.mxu0 0.0
        %1149 = vmatpush1.msra.mxu0 0.0
        %1150 = vmatprep.subr.mxu0 0.0
        %1151 = vmatpush1.msra.mxu0 0.0
        %1152 = vmatprep.subr.mxu0 0.0
        %1153 = vmatpush1.msra.mxu0 0.0
        %1154 = vmatprep.subr.mxu0 0.0
        %1155 = vmatpush1.msra.mxu0 0.0
        %1156 = vmatprep.subr.mxu0 0.0
        %1157 = vmatpush1.msra.mxu0 0.0
        %1158 = vmatprep.subr.mxu0 0.0
        %1159 = vmatpush1.msra.mxu0 0.0
        %1160 = vmatprep.subr.mxu0 0.0
        %1161 = vmatpush1.msra.mxu0 0.0
        %1162 = vmatprep.subr.mxu0 0.0
        %1163 = vmatpush1.msra.mxu0 0.0
        %1164 = vmatprep.subr.mxu0 0.0
        %1165 = vmatpush1.msra.mxu0 0.0
        %1166 = vmatprep.subr.mxu0 0.0
        %1167 = vmatpush1.msra.mxu0 0.0
        %1168 = vmatprep.subr.mxu0 0.0
        %1169 = vmatpush1.msra.mxu0 0.0
        %1170 = vmatprep.subr.mxu0 0.0
        %1171 = vmatpush1.msra.mxu0 0.0
        %1172 = vmatprep.subr.mxu0 0.0
        %1173 = vmatpush1.msra.mxu0 0.0
        %1174 = vmatprep.subr.mxu0 0.0
        %1175 = vmatpush1.msra.mxu0 0.0
        %1176 = vmatprep.subr.mxu0 0.0
        %1177 = vmatpush1.msra.mxu0 0.0
        %1178 = vmatprep.mubr.f32.mxu0 0.0
        %1179 = vmatmul.mubr.f32.gmra.mrb[0].mxu0 %v815
        %v1180 = vpop.f32.mrb[0].mxu0
        %v1181 = vadd.f32 0.0, %v1180
        %v1182 = vpop.f32.mrb[0].mxu0
        %v1183 = vadd.f32 0.0, %v1182
        %1184 = vmatprep.mubr.f32.mxu0 0.0
        %1185 = vmatmul.mubr.f32.gmra.mrb[0].mxu0 %v818
        %v1186 = vpop.f32.mrb[0].mxu0
        %v1187 = vadd.f32 0.0, %v1186
        %v1188 = vpop.f32.mrb[0].mxu0
        %v1189 = vadd.f32 0.0, %v1188
        %1190 = vmatprep.mubr.f32.mxu0 0.0
        %1191 = vmatmul.mubr.f32.gmra.mrb[0].mxu0 %v821
        %v1192 = vpop.f32.mrb[0].mxu0
        %v1193 = vadd.f32 0.0, %v1192
        %v1194 = vpop.f32.mrb[0].mxu0
        %v1195 = vadd.f32 0.0, %v1194
        %1196 = vmatprep.mubr.f32.mxu0 0.0
        %1197 = vmatmul.mubr.f32.gmra.mrb[0].mxu0 %v824
        %v1198 = vpop.f32.mrb[0].mxu0
        %v1199 = vadd.f32 0.0, %v1198
        %v1200 = vpop.f32.mrb[0].mxu0
        %v1201 = vadd.f32 0.0, %v1200
        %1202 = vmatprep.mubr.f32.mxu0 0.0
        %1203 = vmatmul.mubr.f32.gmra.mrb[0].mxu0 %v827
        %v1204 = vpop.f32.mrb[0].mxu0
        %v1205 = vadd.f32 0.0, %v1204
        %v1206 = vpop.f32.mrb[0].mxu0
        %v1207 = vadd.f32 0.0, %v1206
        %1208 = vdwg.mxu0
        %v1209 = vld [vmem:[#allocation5] sm:$0xff]
        %v1210 = vld [vmem:[#allocation5 + $0x8] sm:$0xff]
        %v1211 = vld [vmem:[#allocation5 + $0x10] sm:$0xff]
        %v1212 = vld [vmem:[#allocation5 + $0x18] sm:$0xff]
        %v1213 = vld [vmem:[#allocation5 + $0x20] sm:$0xff]
        %v1215 = vsel %vm813, %v1209, 0
        %v1218 = vsel %vm813, %v1210, 0
        %v1221 = vsel %vm813, %v1211, 0
        %v1224 = vsel %vm813, %v1212, 0
        %v1227 = vsel %vm813, %v1213, 0
        %1229 = vmatprep.subr.mxu0 %v489
        %1230 = vmatpush1.msra.mxu0 %v488
        %1231 = vmatprep.subr.mxu0 %v497
        %1232 = vmatpush1.msra.mxu0 %v496
        %1233 = vmatprep.subr.mxu0 %v505
        %1234 = vmatpush1.msra.mxu0 %v504
        %1235 = vmatprep.subr.mxu0 %v513
        %1236 = vmatpush1.msra.mxu0 %v512
        %1237 = vmatprep.subr.mxu0 %v521
        %1238 = vmatpush1.msra.mxu0 %v520
        %1239 = vmatprep.subr.mxu0 %v529
        %1240 = vmatpush1.msra.mxu0 %v528
        %1241 = vmatprep.subr.mxu0 %v537
        %1242 = vmatpush1.msra.mxu0 %v536
        %1243 = vmatprep.subr.mxu0 %v545
        %1244 = vmatpush1.msra.mxu0 %v544
        %1245 = vmatprep.subr.mxu0 0.0
        %1246 = vmatpush1.msra.mxu0 0.0
        %1247 = vmatprep.subr.mxu0 0.0
        %1248 = vmatpush1.msra.mxu0 0.0
        %1249 = vmatprep.subr.mxu0 0.0
        %1250 = vmatpush1.msra.mxu0 0.0
        %1251 = vmatprep.subr.mxu0 0.0
        %1252 = vmatpush1.msra.mxu0 0.0
        %1253 = vmatprep.subr.mxu0 0.0
        %1254 = vmatpush1.msra.mxu0 0.0
        %1255 = vmatprep.subr.mxu0 0.0
        %1256 = vmatpush1.msra.mxu0 0.0
        %1257 = vmatprep.subr.mxu0 0.0
        %1258 = vmatpush1.msra.mxu0 0.0
        %1259 = vmatprep.subr.mxu0 0.0
        %1260 = vmatpush1.msra.mxu0 0.0
        %1261 = vmatprep.subr.mxu0 0.0
        %1262 = vmatpush1.msra.mxu0 0.0
        %1263 = vmatprep.subr.mxu0 0.0
        %1264 = vmatpush1.msra.mxu0 0.0
        %1265 = vmatprep.subr.mxu0 0.0
        %1266 = vmatpush1.msra.mxu0 0.0
        %1267 = vmatprep.subr.mxu0 0.0
        %1268 = vmatpush1.msra.mxu0 0.0
        %1269 = vmatprep.subr.mxu0 0.0
        %1270 = vmatpush1.msra.mxu0 0.0
        %1271 = vmatprep.subr.mxu0 0.0
        %1272 = vmatpush1.msra.mxu0 0.0
        %1273 = vmatprep.subr.mxu0 0.0
        %1274 = vmatpush1.msra.mxu0 0.0
        %1275 = vmatprep.subr.mxu0 0.0
        %1276 = vmatpush1.msra.mxu0 0.0
        %1277 = vmatprep.subr.mxu0 0.0
        %1278 = vmatpush1.msra.mxu0 0.0
        %1279 = vmatprep.subr.mxu0 0.0
        %1280 = vmatpush1.msra.mxu0 0.0
        %1281 = vmatprep.subr.mxu0 0.0
        %1282 = vmatpush1.msra.mxu0 0.0
        %1283 = vmatprep.subr.mxu0 0.0
        %1284 = vmatpush1.msra.mxu0 0.0
        %1285 = vmatprep.subr.mxu0 0.0
        %1286 = vmatpush1.msra.mxu0 0.0
        %1287 = vmatprep.subr.mxu0 0.0
        %1288 = vmatpush1.msra.mxu0 0.0
        %1289 = vmatprep.subr.mxu0 0.0
        %1290 = vmatpush1.msra.mxu0 0.0
        %1291 = vmatprep.subr.mxu0 0.0
        %1292 = vmatpush1.msra.mxu0 0.0
        %1293 = vmatprep.mubr.f32.mxu0 0.0
        %1294 = vmatmul.mubr.f32.gmra.mrb[0].mxu0 %v1215
        %v1295 = vpop.f32.mrb[0].mxu0
        %v1296 = vadd.f32 0.0, %v1295
        %v1297 = vpop.f32.mrb[0].mxu0
        %v1298 = vadd.f32 0.0, %v1297
        %1299 = vmatprep.mubr.f32.mxu0 0.0
        %1300 = vmatmul.mubr.f32.gmra.mrb[0].mxu0 %v1218
        %v1301 = vpop.f32.mrb[0].mxu0
        %v1302 = vadd.f32 0.0, %v1301
        %v1303 = vpop.f32.mrb[0].mxu0
        %v1304 = vadd.f32 0.0, %v1303
        %1305 = vmatprep.mubr.f32.mxu0 0.0
        %1306 = vmatmul.mubr.f32.gmra.mrb[0].mxu0 %v1221
        %v1307 = vpop.f32.mrb[0].mxu0
        %v1308 = vadd.f32 0.0, %v1307
        %v1309 = vpop.f32.mrb[0].mxu0
        %v1310 = vadd.f32 0.0, %v1309
        %1311 = vmatprep.mubr.f32.mxu0 0.0
        %1312 = vmatmul.mubr.f32.gmra.mrb[0].mxu0 %v1224
        %v1313 = vpop.f32.mrb[0].mxu0
        %v1314 = vadd.f32 0.0, %v1313
        %v1315 = vpop.f32.mrb[0].mxu0
        %v1316 = vadd.f32 0.0, %v1315
        %1317 = vmatprep.mubr.f32.mxu0 0.0
        %1318 = vmatmul.mubr.f32.gmra.mrb[0].mxu0 %v1227
        %v1319 = vpop.f32.mrb[0].mxu0
        %v1320 = vadd.f32 0.0, %v1319
        %v1321 = vpop.f32.mrb[0].mxu0
        %v1322 = vadd.f32 0.0, %v1321
        %1323 = vdwg.mxu0
        %1324 = vmatprep.subr.mxu0 %v491
        %1325 = vmatpush1.msra.mxu0 %v490
        %1326 = vmatprep.subr.mxu0 %v499
        %1327 = vmatpush1.msra.mxu0 %v498
        %1328 = vmatprep.subr.mxu0 %v507
        %1329 = vmatpush1.msra.mxu0 %v506
        %1330 = vmatprep.subr.mxu0 %v515
        %1331 = vmatpush1.msra.mxu0 %v514
        %1332 = vmatprep.subr.mxu0 %v523
        %1333 = vmatpush1.msra.mxu0 %v522
        %1334 = vmatprep.subr.mxu0 %v531
        %1335 = vmatpush1.msra.mxu0 %v530
        %1336 = vmatprep.subr.mxu0 %v539
        %1337 = vmatpush1.msra.mxu0 %v538
        %1338 = vmatprep.subr.mxu0 %v547
        %1339 = vmatpush1.msra.mxu0 %v546
        %1340 = vmatprep.subr.mxu0 0.0
        %1341 = vmatpush1.msra.mxu0 0.0
        %1342 = vmatprep.subr.mxu0 0.0
        %1343 = vmatpush1.msra.mxu0 0.0
        %1344 = vmatprep.subr.mxu0 0.0
        %1345 = vmatpush1.msra.mxu0 0.0
        %1346 = vmatprep.subr.mxu0 0.0
        %1347 = vmatpush1.msra.mxu0 0.0
        %1348 = vmatprep.subr.mxu0 0.0
        %1349 = vmatpush1.msra.mxu0 0.0
        %1350 = vmatprep.subr.mxu0 0.0
        %1351 = vmatpush1.msra.mxu0 0.0
        %1352 = vmatprep.subr.mxu0 0.0
        %1353 = vmatpush1.msra.mxu0 0.0
        %1354 = vmatprep.subr.mxu0 0.0
        %1355 = vmatpush1.msra.mxu0 0.0
        %1356 = vmatprep.subr.mxu0 0.0
        %1357 = vmatpush1.msra.mxu0 0.0
        %1358 = vmatprep.subr.mxu0 0.0
        %1359 = vmatpush1.msra.mxu0 0.0
        %1360 = vmatprep.subr.mxu0 0.0
        %1361 = vmatpush1.msra.mxu0 0.0
        %1362 = vmatprep.subr.mxu0 0.0
        %1363 = vmatpush1.msra.mxu0 0.0
        %1364 = vmatprep.subr.mxu0 0.0
        %1365 = vmatpush1.msra.mxu0 0.0
        %1366 = vmatprep.subr.mxu0 0.0
        %1367 = vmatpush1.msra.mxu0 0.0
        %1368 = vmatprep.subr.mxu0 0.0
        %1369 = vmatpush1.msra.mxu0 0.0
        %1370 = vmatprep.subr.mxu0 0.0
        %1371 = vmatpush1.msra.mxu0 0.0
        %1372 = vmatprep.subr.mxu0 0.0
        %1373 = vmatpush1.msra.mxu0 0.0
        %1374 = vmatprep.subr.mxu0 0.0
        %1375 = vmatpush1.msra.mxu0 0.0
        %1376 = vmatprep.subr.mxu0 0.0
        %1377 = vmatpush1.msra.mxu0 0.0
        %1378 = vmatprep.subr.mxu0 0.0
        %1379 = vmatpush1.msra.mxu0 0.0
        %1380 = vmatprep.subr.mxu0 0.0
        %1381 = vmatpush1.msra.mxu0 0.0
        %1382 = vmatprep.subr.mxu0 0.0
        %1383 = vmatpush1.msra.mxu0 0.0
        %1384 = vmatprep.subr.mxu0 0.0
        %1385 = vmatpush1.msra.mxu0 0.0
        %1386 = vmatprep.subr.mxu0 0.0
        %1387 = vmatpush1.msra.mxu0 0.0
        %1388 = vmatprep.mubr.f32.mxu0 0.0
        %1389 = vmatmul.mubr.f32.gmra.mrb[0].mxu0 %v1215
        %v1390 = vpop.f32.mrb[0].mxu0
        %v1391 = vadd.f32 0.0, %v1390
        %v1392 = vpop.f32.mrb[0].mxu0
        %v1393 = vadd.f32 0.0, %v1392
        %1394 = vmatprep.mubr.f32.mxu0 0.0
        %1395 = vmatmul.mubr.f32.gmra.mrb[0].mxu0 %v1218
        %v1396 = vpop.f32.mrb[0].mxu0
        %v1397 = vadd.f32 0.0, %v1396
        %v1398 = vpop.f32.mrb[0].mxu0
        %v1399 = vadd.f32 0.0, %v1398
        %1400 = vmatprep.mubr.f32.mxu0 0.0
        %1401 = vmatmul.mubr.f32.gmra.mrb[0].mxu0 %v1221
        %v1402 = vpop.f32.mrb[0].mxu0
        %v1403 = vadd.f32 0.0, %v1402
        %v1404 = vpop.f32.mrb[0].mxu0
        %v1405 = vadd.f32 0.0, %v1404
        %1406 = vmatprep.mubr.f32.mxu0 0.0
        %1407 = vmatmul.mubr.f32.gmra.mrb[0].mxu0 %v1224
        %v1408 = vpop.f32.mrb[0].mxu0
        %v1409 = vadd.f32 0.0, %v1408
        %v1410 = vpop.f32.mrb[0].mxu0
        %v1411 = vadd.f32 0.0, %v1410
        %1412 = vmatprep.mubr.f32.mxu0 0.0
        %1413 = vmatmul.mubr.f32.gmra.mrb[0].mxu0 %v1227
        %v1414 = vpop.f32.mrb[0].mxu0
        %v1415 = vadd.f32 0.0, %v1414
        %v1416 = vpop.f32.mrb[0].mxu0
        %v1417 = vadd.f32 0.0, %v1416
        %1418 = vdwg.mxu0
        %1419 = vmatprep.subr.mxu0 %v493
        %1420 = vmatpush1.msra.mxu0 %v492
        %1421 = vmatprep.subr.mxu0 %v501
        %1422 = vmatpush1.msra.mxu0 %v500
        %1423 = vmatprep.subr.mxu0 %v509
        %1424 = vmatpush1.msra.mxu0 %v508
        %1425 = vmatprep.subr.mxu0 %v517
        %1426 = vmatpush1.msra.mxu0 %v516
        %1427 = vmatprep.subr.mxu0 %v525
        %1428 = vmatpush1.msra.mxu0 %v524
        %1429 = vmatprep.subr.mxu0 %v533
        %1430 = vmatpush1.msra.mxu0 %v532
        %1431 = vmatprep.subr.mxu0 %v541
        %1432 = vmatpush1.msra.mxu0 %v540
        %1433 = vmatprep.subr.mxu0 %v549
        %1434 = vmatpush1.msra.mxu0 %v548
        %1435 = vmatprep.subr.mxu0 0.0
        %1436 = vmatpush1.msra.mxu0 0.0
        %1437 = vmatprep.subr.mxu0 0.0
        %1438 = vmatpush1.msra.mxu0 0.0
        %1439 = vmatprep.subr.mxu0 0.0
        %1440 = vmatpush1.msra.mxu0 0.0
        %1441 = vmatprep.subr.mxu0 0.0
        %1442 = vmatpush1.msra.mxu0 0.0
        %1443 = vmatprep.subr.mxu0 0.0
        %1444 = vmatpush1.msra.mxu0 0.0
        %1445 = vmatprep.subr.mxu0 0.0
        %1446 = vmatpush1.msra.mxu0 0.0
        %1447 = vmatprep.subr.mxu0 0.0
        %1448 = vmatpush1.msra.mxu0 0.0
        %1449 = vmatprep.subr.mxu0 0.0
        %1450 = vmatpush1.msra.mxu0 0.0
        %1451 = vmatprep.subr.mxu0 0.0
        %1452 = vmatpush1.msra.mxu0 0.0
        %1453 = vmatprep.subr.mxu0 0.0
        %1454 = vmatpush1.msra.mxu0 0.0
        %1455 = vmatprep.subr.mxu0 0.0
        %1456 = vmatpush1.msra.mxu0 0.0
        %1457 = vmatprep.subr.mxu0 0.0
        %1458 = vmatpush1.msra.mxu0 0.0
        %1459 = vmatprep.subr.mxu0 0.0
        %1460 = vmatpush1.msra.mxu0 0.0
        %1461 = vmatprep.subr.mxu0 0.0
        %1462 = vmatpush1.msra.mxu0 0.0
        %1463 = vmatprep.subr.mxu0 0.0
        %1464 = vmatpush1.msra.mxu0 0.0
        %1465 = vmatprep.subr.mxu0 0.0
        %1466 = vmatpush1.msra.mxu0 0.0
        %1467 = vmatprep.subr.mxu0 0.0
        %1468 = vmatpush1.msra.mxu0 0.0
        %1469 = vmatprep.subr.mxu0 0.0
        %1470 = vmatpush1.msra.mxu0 0.0
        %1471 = vmatprep.subr.mxu0 0.0
        %1472 = vmatpush1.msra.mxu0 0.0
        %1473 = vmatprep.subr.mxu0 0.0
        %1474 = vmatpush1.msra.mxu0 0.0
        %1475 = vmatprep.subr.mxu0 0.0
        %1476 = vmatpush1.msra.mxu0 0.0
        %1477 = vmatprep.subr.mxu0 0.0
        %1478 = vmatpush1.msra.mxu0 0.0
        %1479 = vmatprep.subr.mxu0 0.0
        %1480 = vmatpush1.msra.mxu0 0.0
        %1481 = vmatprep.subr.mxu0 0.0
        %1482 = vmatpush1.msra.mxu0 0.0
        %1483 = vmatprep.mubr.f32.mxu0 0.0
        %1484 = vmatmul.mubr.f32.gmra.mrb[0].mxu0 %v1215
        %v1485 = vpop.f32.mrb[0].mxu0
        %v1486 = vadd.f32 0.0, %v1485
        %v1487 = vpop.f32.mrb[0].mxu0
        %v1488 = vadd.f32 0.0, %v1487
        %1489 = vmatprep.mubr.f32.mxu0 0.0
        %1490 = vmatmul.mubr.f32.gmra.mrb[0].mxu0 %v1218
        %v1491 = vpop.f32.mrb[0].mxu0
        %v1492 = vadd.f32 0.0, %v1491
        %v1493 = vpop.f32.mrb[0].mxu0
        %v1494 = vadd.f32 0.0, %v1493
        %1495 = vmatprep.mubr.f32.mxu0 0.0
        %1496 = vmatmul.mubr.f32.gmra.mrb[0].mxu0 %v1221
        %v1497 = vpop.f32.mrb[0].mxu0
        %v1498 = vadd.f32 0.0, %v1497
        %v1499 = vpop.f32.mrb[0].mxu0
        %v1500 = vadd.f32 0.0, %v1499
        %1501 = vmatprep.mubr.f32.mxu0 0.0
        %1502 = vmatmul.mubr.f32.gmra.mrb[0].mxu0 %v1224
        %v1503 = vpop.f32.mrb[0].mxu0
        %v1504 = vadd.f32 0.0, %v1503
        %v1505 = vpop.f32.mrb[0].mxu0
        %v1506 = vadd.f32 0.0, %v1505
        %1507 = vmatprep.mubr.f32.mxu0 0.0
        %1508 = vmatmul.mubr.f32.gmra.mrb[0].mxu0 %v1227
        %v1509 = vpop.f32.mrb[0].mxu0
        %v1510 = vadd.f32 0.0, %v1509
        %v1511 = vpop.f32.mrb[0].mxu0
        %v1512 = vadd.f32 0.0, %v1511
        %1513 = vdwg.mxu0
        %1514 = vmatprep.subr.mxu0 %v495
        %1515 = vmatpush1.msra.mxu0 %v494
        %1516 = vmatprep.subr.mxu0 %v503
        %1517 = vmatpush1.msra.mxu0 %v502
        %1518 = vmatprep.subr.mxu0 %v511
        %1519 = vmatpush1.msra.mxu0 %v510
        %1520 = vmatprep.subr.mxu0 %v519
        %1521 = vmatpush1.msra.mxu0 %v518
        %1522 = vmatprep.subr.mxu0 %v527
        %1523 = vmatpush1.msra.mxu0 %v526
        %1524 = vmatprep.subr.mxu0 %v535
        %1525 = vmatpush1.msra.mxu0 %v534
        %1526 = vmatprep.subr.mxu0 %v543
        %1527 = vmatpush1.msra.mxu0 %v542
        %1528 = vmatprep.subr.mxu0 %v551
        %1529 = vmatpush1.msra.mxu0 %v550
        %1530 = vmatprep.subr.mxu0 0.0
        %1531 = vmatpush1.msra.mxu0 0.0
        %1532 = vmatprep.subr.mxu0 0.0
        %1533 = vmatpush1.msra.mxu0 0.0
        %1534 = vmatprep.subr.mxu0 0.0
        %1535 = vmatpush1.msra.mxu0 0.0
        %1536 = vmatprep.subr.mxu0 0.0
        %1537 = vmatpush1.msra.mxu0 0.0
        %1538 = vmatprep.subr.mxu0 0.0
        %1539 = vmatpush1.msra.mxu0 0.0
        %1540 = vmatprep.subr.mxu0 0.0
        %1541 = vmatpush1.msra.mxu0 0.0
        %1542 = vmatprep.subr.mxu0 0.0
        %1543 = vmatpush1.msra.mxu0 0.0
        %1544 = vmatprep.subr.mxu0 0.0
        %1545 = vmatpush1.msra.mxu0 0.0
        %1546 = vmatprep.subr.mxu0 0.0
        %1547 = vmatpush1.msra.mxu0 0.0
        %1548 = vmatprep.subr.mxu0 0.0
        %1549 = vmatpush1.msra.mxu0 0.0
        %1550 = vmatprep.subr.mxu0 0.0
        %1551 = vmatpush1.msra.mxu0 0.0
        %1552 = vmatprep.subr.mxu0 0.0
        %1553 = vmatpush1.msra.mxu0 0.0
        %1554 = vmatprep.subr.mxu0 0.0
        %1555 = vmatpush1.msra.mxu0 0.0
        %1556 = vmatprep.subr.mxu0 0.0
        %1557 = vmatpush1.msra.mxu0 0.0
        %1558 = vmatprep.subr.mxu0 0.0
        %1559 = vmatpush1.msra.mxu0 0.0
        %1560 = vmatprep.subr.mxu0 0.0
        %1561 = vmatpush1.msra.mxu0 0.0
        %1562 = vmatprep.subr.mxu0 0.0
        %1563 = vmatpush1.msra.mxu0 0.0
        %1564 = vmatprep.subr.mxu0 0.0
        %1565 = vmatpush1.msra.mxu0 0.0
        %1566 = vmatprep.subr.mxu0 0.0
        %1567 = vmatpush1.msra.mxu0 0.0
        %1568 = vmatprep.subr.mxu0 0.0
        %1569 = vmatpush1.msra.mxu0 0.0
        %1570 = vmatprep.subr.mxu0 0.0
        %1571 = vmatpush1.msra.mxu0 0.0
        %1572 = vmatprep.subr.mxu0 0.0
        %1573 = vmatpush1.msra.mxu0 0.0
        %1574 = vmatprep.subr.mxu0 0.0
        %1575 = vmatpush1.msra.mxu0 0.0
        %1576 = vmatprep.subr.mxu0 0.0
        %1577 = vmatpush1.msra.mxu0 0.0
        %1578 = vmatprep.mubr.f32.mxu0 0.0
        %1579 = vmatmul.mubr.f32.gmra.mrb[0].mxu0 %v1215
        %v1580 = vpop.f32.mrb[0].mxu0
        %v1581 = vadd.f32 0.0, %v1580
        %v1582 = vpop.f32.mrb[0].mxu0
        %v1583 = vadd.f32 0.0, %v1582
        %1584 = vmatprep.mubr.f32.mxu0 0.0
        %1585 = vmatmul.mubr.f32.gmra.mrb[0].mxu0 %v1218
        %v1586 = vpop.f32.mrb[0].mxu0
        %v1587 = vadd.f32 0.0, %v1586
        %v1588 = vpop.f32.mrb[0].mxu0
        %v1589 = vadd.f32 0.0, %v1588
        %1590 = vmatprep.mubr.f32.mxu0 0.0
        %1591 = vmatmul.mubr.f32.gmra.mrb[0].mxu0 %v1221
        %v1592 = vpop.f32.mrb[0].mxu0
        %v1593 = vadd.f32 0.0, %v1592
        %v1594 = vpop.f32.mrb[0].mxu0
        %v1595 = vadd.f32 0.0, %v1594
        %1596 = vmatprep.mubr.f32.mxu0 0.0
        %1597 = vmatmul.mubr.f32.gmra.mrb[0].mxu0 %v1224
        %v1598 = vpop.f32.mrb[0].mxu0
        %v1599 = vadd.f32 0.0, %v1598
        %v1600 = vpop.f32.mrb[0].mxu0
        %v1601 = vadd.f32 0.0, %v1600
        %1602 = vmatprep.mubr.f32.mxu0 0.0
        %1603 = vmatmul.mubr.f32.gmra.mrb[0].mxu0 %v1227
        %v1604 = vpop.f32.mrb[0].mxu0
        %v1605 = vadd.f32 0.0, %v1604
        %v1606 = vpop.f32.mrb[0].mxu0
        %v1607 = vadd.f32 0.0, %v1606
        %1608 = vdwg.mxu0
        %v1609 = vadd.f32 %v902, %v1302
        %v1610 = vadd.f32 %v904, %v1304
        %v1611 = vadd.f32 %v997, %v1397
        %v1612 = vadd.f32 %v999, %v1399
        %v1613 = vadd.f32 %v1092, %v1492
        %v1614 = vadd.f32 %v1094, %v1494
        %v1615 = vadd.f32 %v1187, %v1587
        %v1616 = vadd.f32 %v1189, %v1589
        %v1617 = vadd.f32 %v908, %v1308
        %v1618 = vadd.f32 %v910, %v1310
        %v1619 = vadd.f32 %v1003, %v1403
        %v1620 = vadd.f32 %v1005, %v1405
        %v1621 = vadd.f32 %v1098, %v1498
        %v1622 = vadd.f32 %v1100, %v1500
        %v1623 = vadd.f32 %v1193, %v1593
        %v1624 = vadd.f32 %v1195, %v1595
        %v1625 = vadd.f32 %v914, %v1314
        %v1626 = vadd.f32 %v916, %v1316
        %v1627 = vadd.f32 %v1009, %v1409
        %v1628 = vadd.f32 %v1011, %v1411
        %v1629 = vadd.f32 %v1104, %v1504
        %v1630 = vadd.f32 %v1106, %v1506
        %v1631 = vadd.f32 %v1199, %v1599
        %v1632 = vadd.f32 %v1201, %v1601
        %v1633 = vadd.f32 %v920, %v1320
        %v1634 = vadd.f32 %v922, %v1322
        %v1635 = vadd.f32 %v1015, %v1415
        %v1636 = vadd.f32 %v1017, %v1417
        %v1637 = vadd.f32 %v1110, %v1510
        %v1638 = vadd.f32 %v1112, %v1512
        %v1639 = vadd.f32 %v1205, %v1605
        %v1640 = vadd.f32 %v1207, %v1607
        %v1641 = vld [vmem:[%s3] sm:$0xff]
        %v1642 = vld [vmem:[%s3 + $0x8] sm:$0xff]
        %v1643 = vld [vmem:[%s3 + $0x10] sm:$0xff]
        %v1644 = vld [vmem:[%s3 + $0x18] sm:$0xff]
        %1646 = vset.pattern.permute.xlu0 0
        %1647 = vperm.xlu0 %1646, %v1641
        %v1648 = vpop.permute.xlu0 %1647
        %1651 = vset.pattern.permute.xlu0 0
        %1652 = vperm.xlu0 %1651, %v1642
        %v1653 = vpop.permute.xlu0 %1652
        %1656 = vset.pattern.permute.xlu0 0
        %1657 = vperm.xlu0 %1656, %v1643
        %v1658 = vpop.permute.xlu0 %1657
        %1661 = vset.pattern.permute.xlu0 0
        %1662 = vperm.xlu0 %1661, %v1644
        %v1663 = vpop.permute.xlu0 %1662
        %v1665 = vadd.f32 %v1609, %v1648
        %v1666 = vadd.f32 %v1610, %v1648
        %v1667 = vadd.f32 %v1611, %v1648
        %v1668 = vadd.f32 %v1612, %v1648
        %v1669 = vadd.f32 %v1613, %v1648
        %v1670 = vadd.f32 %v1614, %v1648
        %v1671 = vadd.f32 %v1615, %v1648
        %v1672 = vadd.f32 %v1616, %v1648
        %v1673 = vadd.f32 %v1617, %v1653
        %v1674 = vadd.f32 %v1618, %v1653
        %v1675 = vadd.f32 %v1619, %v1653
        %v1676 = vadd.f32 %v1620, %v1653
        %v1677 = vadd.f32 %v1621, %v1653
        %v1678 = vadd.f32 %v1622, %v1653
        %v1679 = vadd.f32 %v1623, %v1653
        %v1680 = vadd.f32 %v1624, %v1653
        %v1681 = vadd.f32 %v1625, %v1658
        %v1682 = vadd.f32 %v1626, %v1658
        %v1683 = vadd.f32 %v1627, %v1658
        %v1684 = vadd.f32 %v1628, %v1658
        %v1685 = vadd.f32 %v1629, %v1658
        %v1686 = vadd.f32 %v1630, %v1658
        %v1687 = vadd.f32 %v1631, %v1658
        %v1688 = vadd.f32 %v1632, %v1658
        %v1689 = vadd.f32 %v1633, %v1663
        %v1690 = vadd.f32 %v1634, %v1663
        %v1691 = vadd.f32 %v1635, %v1663
        %v1692 = vadd.f32 %v1636, %v1663
        %v1693 = vadd.f32 %v1637, %v1663
        %v1694 = vadd.f32 %v1638, %v1663
        %v1695 = vadd.f32 %v1639, %v1663
        %v1696 = vadd.f32 %v1640, %v1663
        %v1697 = vtanh.pop %v1665
        %v1698 = vtanh.pop %v1666
        %v1699 = vtanh.pop %v1667
        %v1700 = vtanh.pop %v1668
        %v1701 = vtanh.pop %v1669
        %v1702 = vtanh.pop %v1670
        %v1703 = vtanh.pop %v1671
        %v1704 = vtanh.pop %v1672
        %v1705 = vtanh.pop %v1673
        %v1706 = vtanh.pop %v1674
        %v1707 = vtanh.pop %v1675
        %v1708 = vtanh.pop %v1676
        %v1709 = vtanh.pop %v1677
        %v1710 = vtanh.pop %v1678
        %v1711 = vtanh.pop %v1679
        %v1712 = vtanh.pop %v1680
        %v1713 = vtanh.pop %v1681
        %v1714 = vtanh.pop %v1682
        %v1715 = vtanh.pop %v1683
        %v1716 = vtanh.pop %v1684
        %v1717 = vtanh.pop %v1685
        %v1718 = vtanh.pop %v1686
        %v1719 = vtanh.pop %v1687
        %v1720 = vtanh.pop %v1688
        %v1721 = vtanh.pop %v1689
        %v1722 = vtanh.pop %v1690
        %v1723 = vtanh.pop %v1691
        %v1724 = vtanh.pop %v1692
        %v1725 = vtanh.pop %v1693
        %v1726 = vtanh.pop %v1694
        %v1727 = vtanh.pop %v1695
        %v1728 = vtanh.pop %v1696
        %v1729 = vld [vmem:[%s4] sm:$0x3]
        %v1730 = vld [vmem:[%s5] sm:$0x3]
        %1732 = vset.pattern.permute.xlu0 0
        %1733 = vperm.xlu0 %1732, %v1730
        %v1734 = vpop.permute.xlu0 %1733
        %vm1736 = vcmask 261120
        %v1738 = vsel %vm1736, %v1729, 0
        %1740 = vmatprep.subr.mxu0 %v1698
        %1741 = vmatpush1.msra.mxu0 %v1697
        %1742 = vmatprep.subr.mxu0 %v1706
        %1743 = vmatpush1.msra.mxu0 %v1705
        %1744 = vmatprep.subr.mxu0 %v1714
        %1745 = vmatpush1.msra.mxu0 %v1713
        %1746 = vmatprep.subr.mxu0 %v1722
        %1747 = vmatpush1.msra.mxu0 %v1721
        %1748 = vmatprep.subr.mxu0 0.0
        %1749 = vmatpush1.msra.mxu0 0.0
        %1750 = vmatprep.subr.mxu0 0.0
        %1751 = vmatpush1.msra.mxu0 0.0
        %1752 = vmatprep.subr.mxu0 0.0
        %1753 = vmatpush1.msra.mxu0 0.0
        %1754 = vmatprep.subr.mxu0 0.0
        %1755 = vmatpush1.msra.mxu0 0.0
        %1756 = vmatprep.subr.mxu0 0.0
        %1757 = vmatpush1.msra.mxu0 0.0
        %1758 = vmatprep.subr.mxu0 0.0
        %1759 = vmatpush1.msra.mxu0 0.0
        %1760 = vmatprep.subr.mxu0 0.0
        %1761 = vmatpush1.msra.mxu0 0.0
        %1762 = vmatprep.subr.mxu0 0.0
        %1763 = vmatpush1.msra.mxu0 0.0
        %1764 = vmatprep.subr.mxu0 0.0
        %1765 = vmatpush1.msra.mxu0 0.0
        %1766 = vmatprep.subr.mxu0 0.0
        %1767 = vmatpush1.msra.mxu0 0.0
        %1768 = vmatprep.subr.mxu0 0.0
        %1769 = vmatpush1.msra.mxu0 0.0
        %1770 = vmatprep.subr.mxu0 0.0
        %1771 = vmatpush1.msra.mxu0 0.0
        %1772 = vmatprep.subr.mxu0 0.0
        %1773 = vmatpush1.msra.mxu0 0.0
        %1774 = vmatprep.subr.mxu0 0.0
        %1775 = vmatpush1.msra.mxu0 0.0
        %1776 = vmatprep.subr.mxu0 0.0
        %1777 = vmatpush1.msra.mxu0 0.0
        %1778 = vmatprep.subr.mxu0 0.0
        %1779 = vmatpush1.msra.mxu0 0.0
        %1780 = vmatprep.subr.mxu0 0.0
        %1781 = vmatpush1.msra.mxu0 0.0
        %1782 = vmatprep.subr.mxu0 0.0
        %1783 = vmatpush1.msra.mxu0 0.0
        %1784 = vmatprep.subr.mxu0 0.0
        %1785 = vmatpush1.msra.mxu0 0.0
        %1786 = vmatprep.subr.mxu0 0.0
        %1787 = vmatpush1.msra.mxu0 0.0
        %1788 = vmatprep.subr.mxu0 0.0
        %1789 = vmatpush1.msra.mxu0 0.0
        %1790 = vmatprep.subr.mxu0 0.0
        %1791 = vmatpush1.msra.mxu0 0.0
        %1792 = vmatprep.subr.mxu0 0.0
        %1793 = vmatpush1.msra.mxu0 0.0
        %1794 = vmatprep.subr.mxu0 0.0
        %1795 = vmatpush1.msra.mxu0 0.0
        %1796 = vmatprep.subr.mxu0 0.0
        %1797 = vmatpush1.msra.mxu0 0.0
        %1798 = vmatprep.subr.mxu0 0.0
        %1799 = vmatpush1.msra.mxu0 0.0
        %1800 = vmatprep.subr.mxu0 0.0
        %1801 = vmatpush1.msra.mxu0 0.0
        %1802 = vmatprep.subr.mxu0 0.0
        %1803 = vmatpush1.msra.mxu0 0.0
        %1804 = vmatprep.mubr.f32.mxu0 0.0
        %1805 = vmatmul.mubr.f32.gmra.mrb[0].mxu0 %v1738
        %v1806 = vpop.f32.mrb[0].mxu0
        %v1807 = vadd.f32 %v1734, %v1806
        %v1808 = vpop.f32.mrb[0].mxu0
        %v1809 = vadd.f32 %v1734, %v1808
        %1810 = vdwg.mxu0
        %1811 = vmatprep.subr.mxu0 %v1700
        %1812 = vmatpush1.msra.mxu0 %v1699
        %1813 = vmatprep.subr.mxu0 %v1708
        %1814 = vmatpush1.msra.mxu0 %v1707
        %1815 = vmatprep.subr.mxu0 %v1716
        %1816 = vmatpush1.msra.mxu0 %v1715
        %1817 = vmatprep.subr.mxu0 %v1724
        %1818 = vmatpush1.msra.mxu0 %v1723
        %1819 = vmatprep.subr.mxu0 0.0
        %1820 = vmatpush1.msra.mxu0 0.0
        %1821 = vmatprep.subr.mxu0 0.0
        %1822 = vmatpush1.msra.mxu0 0.0
        %1823 = vmatprep.subr.mxu0 0.0
        %1824 = vmatpush1.msra.mxu0 0.0
        %1825 = vmatprep.subr.mxu0 0.0
        %1826 = vmatpush1.msra.mxu0 0.0
        %1827 = vmatprep.subr.mxu0 0.0
        %1828 = vmatpush1.msra.mxu0 0.0
        %1829 = vmatprep.subr.mxu0 0.0
        %1830 = vmatpush1.msra.mxu0 0.0
        %1831 = vmatprep.subr.mxu0 0.0
        %1832 = vmatpush1.msra.mxu0 0.0
        %1833 = vmatprep.subr.mxu0 0.0
        %1834 = vmatpush1.msra.mxu0 0.0
        %1835 = vmatprep.subr.mxu0 0.0
        %1836 = vmatpush1.msra.mxu0 0.0
        %1837 = vmatprep.subr.mxu0 0.0
        %1838 = vmatpush1.msra.mxu0 0.0
        %1839 = vmatprep.subr.mxu0 0.0
        %1840 = vmatpush1.msra.mxu0 0.0
        %1841 = vmatprep.subr.mxu0 0.0
        %1842 = vmatpush1.msra.mxu0 0.0
        %1843 = vmatprep.subr.mxu0 0.0
        %1844 = vmatpush1.msra.mxu0 0.0
        %1845 = vmatprep.subr.mxu0 0.0
        %1846 = vmatpush1.msra.mxu0 0.0
        %1847 = vmatprep.subr.mxu0 0.0
        %1848 = vmatpush1.msra.mxu0 0.0
        %1849 = vmatprep.subr.mxu0 0.0
        %1850 = vmatpush1.msra.mxu0 0.0
        %1851 = vmatprep.subr.mxu0 0.0
        %1852 = vmatpush1.msra.mxu0 0.0
        %1853 = vmatprep.subr.mxu0 0.0
        %1854 = vmatpush1.msra.mxu0 0.0
        %1855 = vmatprep.subr.mxu0 0.0
        %1856 = vmatpush1.msra.mxu0 0.0
        %1857 = vmatprep.subr.mxu0 0.0
        %1858 = vmatpush1.msra.mxu0 0.0
        %1859 = vmatprep.subr.mxu0 0.0
        %1860 = vmatpush1.msra.mxu0 0.0
        %1861 = vmatprep.subr.mxu0 0.0
        %1862 = vmatpush1.msra.mxu0 0.0
        %1863 = vmatprep.subr.mxu0 0.0
        %1864 = vmatpush1.msra.mxu0 0.0
        %1865 = vmatprep.subr.mxu0 0.0
        %1866 = vmatpush1.msra.mxu0 0.0
        %1867 = vmatprep.subr.mxu0 0.0
        %1868 = vmatpush1.msra.mxu0 0.0
        %1869 = vmatprep.subr.mxu0 0.0
        %1870 = vmatpush1.msra.mxu0 0.0
        %1871 = vmatprep.subr.mxu0 0.0
        %1872 = vmatpush1.msra.mxu0 0.0
        %1873 = vmatprep.subr.mxu0 0.0
        %1874 = vmatpush1.msra.mxu0 0.0
        %1875 = vmatprep.mubr.f32.mxu0 0.0
        %1876 = vmatmul.mubr.f32.gmra.mrb[0].mxu0 %v1738
        %v1877 = vpop.f32.mrb[0].mxu0
        %v1878 = vadd.f32 %v1734, %v1877
        %v1879 = vpop.f32.mrb[0].mxu0
        %v1880 = vadd.f32 %v1734, %v1879
        %1881 = vdwg.mxu0
        %1882 = vmatprep.subr.mxu0 %v1702
        %1883 = vmatpush1.msra.mxu0 %v1701
        %1884 = vmatprep.subr.mxu0 %v1710
        %1885 = vmatpush1.msra.mxu0 %v1709
        %1886 = vmatprep.subr.mxu0 %v1718
        %1887 = vmatpush1.msra.mxu0 %v1717
        %1888 = vmatprep.subr.mxu0 %v1726
        %1889 = vmatpush1.msra.mxu0 %v1725
        %1890 = vmatprep.subr.mxu0 0.0
        %1891 = vmatpush1.msra.mxu0 0.0
        %1892 = vmatprep.subr.mxu0 0.0
        %1893 = vmatpush1.msra.mxu0 0.0
        %1894 = vmatprep.subr.mxu0 0.0
        %1895 = vmatpush1.msra.mxu0 0.0
        %1896 = vmatprep.subr.mxu0 0.0
        %1897 = vmatpush1.msra.mxu0 0.0
        %1898 = vmatprep.subr.mxu0 0.0
        %1899 = vmatpush1.msra.mxu0 0.0
        %1900 = vmatprep.subr.mxu0 0.0
        %1901 = vmatpush1.msra.mxu0 0.0
        %1902 = vmatprep.subr.mxu0 0.0
        %1903 = vmatpush1.msra.mxu0 0.0
        %1904 = vmatprep.subr.mxu0 0.0
        %1905 = vmatpush1.msra.mxu0 0.0
        %1906 = vmatprep.subr.mxu0 0.0
        %1907 = vmatpush1.msra.mxu0 0.0
        %1908 = vmatprep.subr.mxu0 0.0
        %1909 = vmatpush1.msra.mxu0 0.0
        %1910 = vmatprep.subr.mxu0 0.0
        %1911 = vmatpush1.msra.mxu0 0.0
        %1912 = vmatprep.subr.mxu0 0.0
        %1913 = vmatpush1.msra.mxu0 0.0
        %1914 = vmatprep.subr.mxu0 0.0
        %1915 = vmatpush1.msra.mxu0 0.0
        %1916 = vmatprep.subr.mxu0 0.0
        %1917 = vmatpush1.msra.mxu0 0.0
        %1918 = vmatprep.subr.mxu0 0.0
        %1919 = vmatpush1.msra.mxu0 0.0
        %1920 = vmatprep.subr.mxu0 0.0
        %1921 = vmatpush1.msra.mxu0 0.0
        %1922 = vmatprep.subr.mxu0 0.0
        %1923 = vmatpush1.msra.mxu0 0.0
        %1924 = vmatprep.subr.mxu0 0.0
        %1925 = vmatpush1.msra.mxu0 0.0
        %1926 = vmatprep.subr.mxu0 0.0
        %1927 = vmatpush1.msra.mxu0 0.0
        %1928 = vmatprep.subr.mxu0 0.0
        %1929 = vmatpush1.msra.mxu0 0.0
        %1930 = vmatprep.subr.mxu0 0.0
        %1931 = vmatpush1.msra.mxu0 0.0
        %1932 = vmatprep.subr.mxu0 0.0
        %1933 = vmatpush1.msra.mxu0 0.0
        %1934 = vmatprep.subr.mxu0 0.0
        %1935 = vmatpush1.msra.mxu0 0.0
        %1936 = vmatprep.subr.mxu0 0.0
        %1937 = vmatpush1.msra.mxu0 0.0
        %1938 = vmatprep.subr.mxu0 0.0
        %1939 = vmatpush1.msra.mxu0 0.0
        %1940 = vmatprep.subr.mxu0 0.0
        %1941 = vmatpush1.msra.mxu0 0.0
        %1942 = vmatprep.subr.mxu0 0.0
        %1943 = vmatpush1.msra.mxu0 0.0
        %1944 = vmatprep.subr.mxu0 0.0
        %1945 = vmatpush1.msra.mxu0 0.0
        %1946 = vmatprep.mubr.f32.mxu0 0.0
        %1947 = vmatmul.mubr.f32.gmra.mrb[0].mxu0 %v1738
        %v1948 = vpop.f32.mrb[0].mxu0
        %v1949 = vadd.f32 %v1734, %v1948
        %v1950 = vpop.f32.mrb[0].mxu0
        %v1951 = vadd.f32 %v1734, %v1950
        %1952 = vdwg.mxu0
        %1953 = vmatprep.subr.mxu0 %v1704
        %1954 = vmatpush1.msra.mxu0 %v1703
        %1955 = vmatprep.subr.mxu0 %v1712
        %1956 = vmatpush1.msra.mxu0 %v1711
        %1957 = vmatprep.subr.mxu0 %v1720
        %1958 = vmatpush1.msra.mxu0 %v1719
        %1959 = vmatprep.subr.mxu0 %v1728
        %1960 = vmatpush1.msra.mxu0 %v1727
        %1961 = vmatprep.subr.mxu0 0.0
        %1962 = vmatpush1.msra.mxu0 0.0
        %1963 = vmatprep.subr.mxu0 0.0
        %1964 = vmatpush1.msra.mxu0 0.0
        %1965 = vmatprep.subr.mxu0 0.0
        %1966 = vmatpush1.msra.mxu0 0.0
        %1967 = vmatprep.subr.mxu0 0.0
        %1968 = vmatpush1.msra.mxu0 0.0
        %1969 = vmatprep.subr.mxu0 0.0
        %1970 = vmatpush1.msra.mxu0 0.0
        %1971 = vmatprep.subr.mxu0 0.0
        %1972 = vmatpush1.msra.mxu0 0.0
        %1973 = vmatprep.subr.mxu0 0.0
        %1974 = vmatpush1.msra.mxu0 0.0
        %1975 = vmatprep.subr.mxu0 0.0
        %1976 = vmatpush1.msra.mxu0 0.0
        %1977 = vmatprep.subr.mxu0 0.0
        %1978 = vmatpush1.msra.mxu0 0.0
        %1979 = vmatprep.subr.mxu0 0.0
        %1980 = vmatpush1.msra.mxu0 0.0
        %1981 = vmatprep.subr.mxu0 0.0
        %1982 = vmatpush1.msra.mxu0 0.0
        %1983 = vmatprep.subr.mxu0 0.0
        %1984 = vmatpush1.msra.mxu0 0.0
        %1985 = vmatprep.subr.mxu0 0.0
        %1986 = vmatpush1.msra.mxu0 0.0
        %1987 = vmatprep.subr.mxu0 0.0
        %1988 = vmatpush1.msra.mxu0 0.0
        %1989 = vmatprep.subr.mxu0 0.0
        %1990 = vmatpush1.msra.mxu0 0.0
        %1991 = vmatprep.subr.mxu0 0.0
        %1992 = vmatpush1.msra.mxu0 0.0
        %1993 = vmatprep.subr.mxu0 0.0
        %1994 = vmatpush1.msra.mxu0 0.0
        %1995 = vmatprep.subr.mxu0 0.0
        %1996 = vmatpush1.msra.mxu0 0.0
        %1997 = vmatprep.subr.mxu0 0.0
        %1998 = vmatpush1.msra.mxu0 0.0
        %1999 = vmatprep.subr.mxu0 0.0
        %2000 = vmatpush1.msra.mxu0 0.0
        %2001 = vmatprep.subr.mxu0 0.0
        %2002 = vmatpush1.msra.mxu0 0.0
        %2003 = vmatprep.subr.mxu0 0.0
        %2004 = vmatpush1.msra.mxu0 0.0
        %2005 = vmatprep.subr.mxu0 0.0
        %2006 = vmatpush1.msra.mxu0 0.0
        %2007 = vmatprep.subr.mxu0 0.0
        %2008 = vmatpush1.msra.mxu0 0.0
        %2009 = vmatprep.subr.mxu0 0.0
        %2010 = vmatpush1.msra.mxu0 0.0
        %2011 = vmatprep.subr.mxu0 0.0
        %2012 = vmatpush1.msra.mxu0 0.0
        %2013 = vmatprep.subr.mxu0 0.0
        %2014 = vmatpush1.msra.mxu0 0.0
        %2015 = vmatprep.subr.mxu0 0.0
        %2016 = vmatpush1.msra.mxu0 0.0
        %2017 = vmatprep.mubr.f32.mxu0 0.0
        %2018 = vmatmul.mubr.f32.gmra.mrb[0].mxu0 %v1738
        %v2019 = vpop.f32.mrb[0].mxu0
        %v2020 = vadd.f32 %v1734, %v2019
        %v2021 = vpop.f32.mrb[0].mxu0
        %v2022 = vadd.f32 %v1734, %v2021
        %2023 = vdwg.mxu0
        %v2024 = vlaneseq
        %v2025 = vshrl.u32 %v2024, 7
        %v2026 = vsub.s32 1, %v2025
        %v2027 = vrot.slane %v1807, %v2026
        %v2028 = vlaneseq
        %v2029 = vshrl.u32 %v2028, 7
        %v2030 = vsub.s32 1, %v2029
        %v2031 = vrot.slane %v1809, %v2030
        %v2032 = vlaneseq
        %v2033 = vshrl.u32 %v2032, 7
        %v2034 = vsub.s32 1, %v2033
        %v2035 = vrot.slane %v1878, %v2034
        %v2036 = vlaneseq
        %v2037 = vshrl.u32 %v2036, 7
        %v2038 = vsub.s32 1, %v2037
        %v2039 = vrot.slane %v1880, %v2038
        %v2040 = vlaneseq
        %v2041 = vshrl.u32 %v2040, 7
        %v2042 = vsub.s32 1, %v2041
        %v2043 = vrot.slane %v1949, %v2042
        %v2044 = vlaneseq
        %v2045 = vshrl.u32 %v2044, 7
        %v2046 = vsub.s32 1, %v2045
        %v2047 = vrot.slane %v1951, %v2046
        %v2048 = vlaneseq
        %v2049 = vshrl.u32 %v2048, 7
        %v2050 = vsub.s32 1, %v2049
        %v2051 = vrot.slane %v2020, %v2050
        %v2052 = vlaneseq
        %v2053 = vshrl.u32 %v2052, 7
        %v2054 = vsub.s32 1, %v2053
        %v2055 = vrot.slane %v2022, %v2054
        %v2056 = vmul.f32 %v2027, %v1296
        %v2057 = vmul.f32 %v2031, %v1298
        %v2058 = vmul.f32 %v2035, %v1391
        %v2059 = vmul.f32 %v2039, %v1393
        %v2060 = vmul.f32 %v2043, %v1486
        %v2061 = vmul.f32 %v2047, %v1488
        %v2062 = vmul.f32 %v2051, %v1581
        %v2063 = vmul.f32 %v2055, %v1583
        %v2064 = vsub.f32 %v896, %v2056
        %v2065 = vsub.f32 %v898, %v2057
        %v2066 = vsub.f32 %v991, %v2058
        %v2067 = vsub.f32 %v993, %v2059
        %v2068 = vsub.f32 %v1086, %v2060
        %v2069 = vsub.f32 %v1088, %v2061
        %v2070 = vsub.f32 %v1181, %v2062
        %v2071 = vsub.f32 %v1183, %v2063
        %v2072 = vlaneseq
        %v2073 = vshrl.u32 %v2072, 7
        %v2074 = vsub.s32 0, %v2073
        %v2075 = vrot.slane %v1807, %v2074
        %v2076 = vlaneseq
        %v2077 = vshrl.u32 %v2076, 7
        %v2078 = vsub.s32 0, %v2077
        %v2079 = vrot.slane %v1809, %v2078
        %v2080 = vlaneseq
        %v2081 = vshrl.u32 %v2080, 7
        %v2082 = vsub.s32 0, %v2081
        %v2083 = vrot.slane %v1878, %v2082
        %v2084 = vlaneseq
        %v2085 = vshrl.u32 %v2084, 7
        %v2086 = vsub.s32 0, %v2085
        %v2087 = vrot.slane %v1880, %v2086
        %v2088 = vlaneseq
        %v2089 = vshrl.u32 %v2088, 7
        %v2090 = vsub.s32 0, %v2089
        %v2091 = vrot.slane %v1949, %v2090
        %v2092 = vlaneseq
        %v2093 = vshrl.u32 %v2092, 7
        %v2094 = vsub.s32 0, %v2093
        %v2095 = vrot.slane %v1951, %v2094
        %v2096 = vlaneseq
        %v2097 = vshrl.u32 %v2096, 7
        %v2098 = vsub.s32 0, %v2097
        %v2099 = vrot.slane %v2020, %v2098
        %v2100 = vlaneseq
        %v2101 = vshrl.u32 %v2100, 7
        %v2102 = vsub.s32 0, %v2101
        %v2103 = vrot.slane %v2022, %v2102
        %v2104 = vmul.f32 %v2075, %v2064
        %v2105 = vmul.f32 %v2079, %v2065
        %v2106 = vmul.f32 %v2083, %v2066
        %v2107 = vmul.f32 %v2087, %v2067
        %v2108 = vmul.f32 %v2091, %v2068
        %v2109 = vmul.f32 %v2095, %v2069
        %v2110 = vmul.f32 %v2099, %v2070
        %v2111 = vmul.f32 %v2103, %v2071
        %2112 = vst [vmem:[%s282] sm:$0xff] %v2104
        %2113 = vst [vmem:[%s282 + $0x8] sm:$0xff] %v2105
        %2114 = vst [vmem:[%s282 + $0x10] sm:$0xff] %v2106
        %2115 = vst [vmem:[%s282 + $0x18] sm:$0xff] %v2107
        %2116 = vst [vmem:[%s282 + $0x20] sm:$0xff] %v2108
        %2117 = vst [vmem:[%s282 + $0x28] sm:$0xff] %v2109
        %2118 = vst [vmem:[%s282 + $0x30] sm:$0xff] %v2110
        %2119 = vst [vmem:[%s282 + $0x38] sm:$0xff] %v2111
        %s2120 = sand.u32 %s163, 1
        %s2121 = scalar_lea.sflag [#allocation4], %s2120
        %s2122 = sand.u32 %s163, 1
        %s2123 = smul.addr %s2122, 64
        %s2124 = scalar_lea.vmem [#allocation7], %s2123
        // Predicated region
        $region53: #{tpu_custom_call.1} parent=43 // pred_check
          %p2125 = pneg %p173
        $region54: #{tpu_custom_call.1} parent=43 // pred_check_branch
          %2127 = sbr.rel (%p2125) target = $region56
        $region55: #{tpu_custom_call.1} parent=43 // pred_region
          %s2128 = smul.u32 8, %s24
          %s2130 = ssub.s32 1024, 1024
          %2131 = vsyncadd %s2121, %s2130
          %s2132 = smul.addr %s2128, 128
          %s2133 = scalar_lea.hbm %s6, %s2132
          %s2135 = sshll.u32 %s2124, 4
          %s2136 = int_to_ptr.vmem [resolvable:$true] %s2135
          %2138 = dma.vmem_to_hbm [thread:$0]  %s2136, 1024, %s2133, %s2121
        $region56: #{tpu_custom_call.1} parent=43 // pred_fallthru
          _
      $region44: #{tpu_custom_call.1} parent=5 // pred_fallthru
        _
      %p2139 = scmp.le.s32.totalorder 2, %s19
      // Predicated region
      $region57: #{tpu_custom_call.1} parent=5 // pred_check
        %p2140 = pneg %p2139
      $region58: #{tpu_custom_call.1} parent=5 // pred_check_branch
        %2142 = sbr.rel (%p2140) target = $region60
      $region59: #{tpu_custom_call.1} parent=5 // pred_region
        %s2143 = ssub.s32 %s19, 2
        // Predicated region
        $region61: #{tpu_custom_call.1} parent=59 // pred_check
          %p2144 = pneg %p179
        $region62: #{tpu_custom_call.1} parent=59 // pred_check_branch
          %2146 = sbr.rel (%p2144) target = $region64
        $region63: #{tpu_custom_call.1} parent=59 // pred_region
          %s2147 = sand.u32 %s164, 1
          %s2148 = scalar_lea.sflag [#allocation4], %s2147
          %s2149 = sand.u32 %s164, 1
          %s2150 = smul.addr %s2149, 64
          %s2151 = scalar_lea.vmem [#allocation7], %s2150
          %2152 = dma.done %s2148, 1024
        $region64: #{tpu_custom_call.1} parent=59 // pred_fallthru
          _
      $region60: #{tpu_custom_call.1} parent=5 // pred_fallthru
        _
    $region6: #{tpu_custom_call.1} parent=1 // loop_footer
      %s23 = sadd.s32 1, %s19
    $region7: #{tpu_custom_call.1} parent=1 // loop_footer_branch
      %18 = sbr.rel target = $region3
    $region8: #{tpu_custom_call.1} parent=1 // loop_exit
      _
    %2153 = vsyncpa [#allocation3], 1
    %s2154 = scalar_lea.sflag [#allocation3], 1
    %2155 = vsyncpa %s2154, 1
    %2156 = vsyncpa [#allocation6], 1
    %2157 = vsyncpa [#allocation4], 1
    %s2158 = scalar_lea.sflag [#allocation4], 1
    %2159 = vsyncpa %s2158, 1

</llo_original>
